<compile_context>
chip_gen: v5e
topology: v5e:2x2
jax: 0.10.0
libtpu: 0.0.40
codegen_flags: <defaults>
</compile_context>

<pallas_src>
import functools

import jax
import jax.numpy as jnp
from jax.experimental import pallas as pl
from jax.experimental.pallas import tpu as pltpu

EPS = 1e-3  # nn.BatchNorm2d(eps=0.001)


def _round_up(x, m):
    return (x + m - 1) // m * m


def _tile_bytes(shape, dtype):
    """Rough VMEM footprint of an array once laid out in (sublane, lane) tiles."""
    isz = jnp.dtype(dtype).itemsize
    sub = 8 * max(1, 4 // isz)              # 8 sublanes for f32, 16 for bf16
    if len(shape) < 2:
        return _round_up(int(shape[0]) if shape else 1, 128) * isz
    lead = 1
    for d in shape[:-2]:
        lead *= int(d)
    return lead * _round_up(int(shape[-2]), sub) * _round_up(int(shape[-1]), 128) * isz


def _vmem_limit_bytes():
    """Per-chip scoped-VMEM budget (v7x ~48 MiB of 64; v5e/v6e up to ~96 MiB)."""
    cap = None
    try:
        info = pltpu.get_tpu_info()
        cap = getattr(info, "vmem_capacity_bytes", None)
    except Exception:
        cap = None
    if not cap:
        cap = 64 * 1024 * 1024              # conservative: v7x physical VMEM
    return int(min(cap * 3 // 4, 100 * 1024 * 1024))


# --------------------------------------------------------------------- pass 1
def _conv_stats_kernel(x_ref, w_ref, conv_ref, stats_ref, *, th, ow, ce, cout,
                       khd, kwd):
    # x_ref:    (HPs, WPs, CE)   whole padded (space-to-depth'd) image, resident
    # w_ref:    (KT, CE, Cout)   resident
    # conv_ref: (TH, OW, Cout)   this row-tile's conv output
    # stats_ref:(2, Cout)        [tile channel mean ; tile centered sum-of-squares]
    r0 = pl.program_id(1) * th
    acc = jnp.zeros((th * ow, cout), jnp.float32)
    for i in range(khd):                                    # unrolled taps
        for j in range(kwd):
            patch = x_ref[pl.ds(r0 + i, th), pl.ds(j, ow), :]      # (TH, OW, CE)
            acc = acc + jnp.dot(patch.reshape(th * ow, ce),
                                w_ref[i * kwd + j],
                                preferred_element_type=jnp.float32)
    conv_ref[...] = acc.reshape(th, ow, cout).astype(conv_ref.dtype)
    mean = jnp.sum(acc, axis=0, keepdims=True) * (1.0 / (th * ow))   # f32, pre-cast
    centered = acc - mean
    stats_ref[0:1, :] = mean
    stats_ref[1:2, :] = jnp.sum(centered * centered, axis=0, keepdims=True)


# --------------------------------------------------------------------- pass 2
def _bn_relu_kernel(conv_ref, scale_ref, bias_ref, o_ref):
    x = conv_ref[...].astype(jnp.float32)                   # (TH, OW, Cout)
    o_ref[...] = jnp.maximum(x * scale_ref[...] + bias_ref[...], 0.0
                             ).astype(o_ref.dtype)


@functools.partial(jax.jit, static_argnames=("stride", "pad", "th",
                                             "matmul_dtype", "vmem_limit",
                                             "nchw_out"))
def _basic_conv2d_impl(x, weight, gamma, beta, *, stride, pad, th, matmul_dtype,
                       vmem_limit, nchw_out):
    n, cin, h, w = x.shape
    cout, _, kh, kw = weight.shape
    s = stride
    oh = (h + 2 * pad - kh) // s + 1
    ow = (w + 2 * pad - kw) // s + 1
    khd = (kh - 1) // s + 1
    kwd = (kw - 1) // s + 1
    kt = khd * kwd
    ce = s * s * cin
    assert oh % th == 0
    n_t = oh // th
    f32 = jnp.dtype(jnp.float32)
    conv_dtype = jnp.float32 if matmul_dtype == f32 else matmul_dtype

    # ---- wrapper-side layout prep (O(input) bytes once; replaces 9x im2col).
    #      Space-to-depth turns a stride-s conv into a stride-1 conv with
    #      s*s*Cin channels and ceil(K/s) taps; for s=1 it is a no-op.
    xh = jnp.transpose(x, (0, 2, 3, 1))                              # NHWC
    hps = max(-(-(h + 2 * pad) // s), oh + khd - 1)
    wps = max(-(-(w + 2 * pad) // s), ow + kwd - 1)
    xh = jnp.pad(xh, ((0, 0), (pad, hps * s - h - pad),
                      (pad, wps * s - w - pad), (0, 0)))
    xs = xh.reshape(n, hps, s, wps, s, cin)
    xs = jnp.transpose(xs, (0, 1, 3, 2, 4, 5)).reshape(n, hps, wps, ce)
    xs = xs.astype(matmul_dtype)

    w_khwc = jnp.transpose(weight, (2, 3, 1, 0))                     # (KH,KW,Cin,Cout)
    w_full = jnp.zeros((khd * s, kwd * s, cin, cout), weight.dtype
                       ).at[:kh, :kw].set(w_khwc)
    w_eff = jnp.transpose(w_full.reshape(khd, s, kwd, s, cin, cout),
                          (0, 2, 1, 3, 4, 5)).reshape(kt, ce, cout)
    w_eff = w_eff.astype(matmul_dtype)

    # ---- pass 1: direct conv + per-tile channel stats
    kernel1 = functools.partial(_conv_stats_kernel, th=th, ow=ow, ce=ce,
                                cout=cout, khd=khd, kwd=kwd)
    conv, stats = pl.pallas_call(
        kernel1,
        out_shape=(jax.ShapeDtypeStruct((n, oh, ow, cout), conv_dtype),
                   jax.ShapeDtypeStruct((n, n_t, 2, cout), jnp.float32)),
        grid_spec=pltpu.PrefetchScalarGridSpec(
            num_scalar_prefetch=0,
            grid=(n, n_t),
            in_specs=[
                # whole padded image: DMA'd once per batch element, revisited over t
                pl.BlockSpec((None, hps, wps, ce), lambda b, t: (b, 0, 0, 0)),
                # weights resident
                pl.BlockSpec((kt, ce, cout), lambda b, t: (0, 0, 0)),
            ],
            out_specs=(
                pl.BlockSpec((None, th, ow, cout), lambda b, t: (b, t, 0, 0)),
                pl.BlockSpec((None, None, 2, cout), lambda b, t: (b, t, 0, 0)),
            ),
        ),
        compiler_params=pltpu.CompilerParams(
            dimension_semantics=("parallel", "parallel"),
            vmem_limit_bytes=vmem_limit,
        ),
        cost_estimate=pl.CostEstimate(
            flops=2 * n * oh * ow * kt * ce * cout,
            transcendentals=0,
            bytes_accessed=(xs.size * xs.dtype.itemsize
                            + w_eff.size * w_eff.dtype.itemsize
                            + n * oh * ow * cout * jnp.dtype(conv_dtype).itemsize
                            + n * n_t * 2 * cout * 4),
        ),
    )(xs, w_eff)

    # ---- tiny Chan-style stats combine + BN scale/bias (also the cross-core
    #      combine on v7x).  All tiles have the same count th*ow.
    cnt = float(th * ow)
    m_total = float(n * oh * ow)
    tile_mean = stats[:, :, 0, :]                                    # (N, n_t, Cout)
    tile_m2 = stats[:, :, 1, :]
    mean = jnp.mean(tile_mean, axis=(0, 1))                          # (Cout,)
    var = (jnp.sum(tile_m2, axis=(0, 1))
           + cnt * jnp.sum((tile_mean - mean) ** 2, axis=(0, 1))) / m_total
    var = jnp.maximum(var, 0.0)                                      # biased var
    scale = (gamma.astype(jnp.float32) * jax.lax.rsqrt(var + EPS)).reshape(1, cout)
    bias = beta.astype(jnp.float32).reshape(1, cout) - mean.reshape(1, cout) * scale

    # ---- pass 2: streaming normalize + affine + ReLU
    out = pl.pallas_call(
        _bn_relu_kernel,
        out_shape=jax.ShapeDtypeStruct((n, oh, ow, cout), jnp.float32),
        grid_spec=pltpu.PrefetchScalarGridSpec(
            num_scalar_prefetch=0,
            grid=(n, n_t),
            in_specs=[
                pl.BlockSpec((None, th, ow, cout), lambda b, t: (b, t, 0, 0)),
                pl.BlockSpec((1, cout), lambda b, t: (0, 0)),        # scale, once
                pl.BlockSpec((1, cout), lambda b, t: (0, 0)),        # bias, once
            ],
            out_specs=pl.BlockSpec((None, th, ow, cout), lambda b, t: (b, t, 0, 0)),
        ),
        compiler_params=pltpu.CompilerParams(
            dimension_semantics=("parallel", "parallel"),
            vmem_limit_bytes=vmem_limit,
        ),
    )(conv, scale, bias)

    if nchw_out:
        # PyTorch parity; pass nchw_out=False to keep NHWC and skip this copy.
        out = jnp.transpose(out, (0, 3, 1, 2))
    return out


def basic_conv2d(x, weight, gamma, beta, *, stride, pad,
                 matmul_dtype=jnp.bfloat16, nchw_out=True, max_tile_rows=None):
    """x: (N,Cin,H,W) f32; weight: (Cout,Cin,KH,KW); gamma/beta: (Cout,)."""
    matmul_dtype = jnp.dtype(matmul_dtype)
    n, cin, h, w = x.shape
    cout, _, kh, kw = weight.shape
    s = stride
    oh = (h + 2 * pad - kh) // s + 1
    ow = (w + 2 * pad - kw) // s + 1
    khd = (kh - 1) // s + 1
    kwd = (kw - 1) // s + 1
    ce = s * s * cin
    hps = max(-(-(h + 2 * pad) // s), oh + khd - 1)
    wps = max(-(-(w + 2 * pad) // s), ow + kwd - 1)

    vmem_limit = _vmem_limit_bytes()
    conv_dtype = jnp.float32 if matmul_dtype == jnp.dtype(jnp.float32) else matmul_dtype

    # Fixed per-step VMEM (independent of tile height): resident image + weights.
    fixed = (2 * _tile_bytes((hps, wps, ce), matmul_dtype)
             + 2 * _tile_bytes((khd * kwd, ce, cout), matmul_dtype))
    # Pick the largest row-tile (divisor of OH -> no partial tiles, no masking)
    # whose buffers fit the per-chip VMEM budget: few, large grid steps.
    th = 1
    for cand in range(1, oh + 1):
        if max_tile_rows is not None and cand > max_tile_rows:
            break
        if oh % cand:
            continue
        per_tile = (2 * _tile_bytes((cand, ow, cout), conv_dtype)
                    + 2 * _tile_bytes((cand, ow, cout), jnp.float32)
                    + 3 * _tile_bytes((cand * ow, max(ce, cout)), jnp.float32))
        if fixed + per_tile <= vmem_limit:
            th = cand

    return _basic_conv2d_impl(x, weight, gamma, beta, stride=stride, pad=pad,
                              th=th, matmul_dtype=matmul_dtype,
                              vmem_limit=vmem_limit, nchw_out=nchw_out)


def _reference(x, weight, gamma, beta, *, stride, pad):
    conv = jax.lax.conv_general_dilated(
        x, weight, window_strides=(stride, stride),
        padding=((pad, pad), (pad, pad)),
        dimension_numbers=("NCHW", "OIHW", "NCHW"),
        precision=jax.lax.Precision.HIGHEST)
    mean = conv.mean(axis=(0, 2, 3), keepdims=True)
    var = ((conv - mean) ** 2).mean(axis=(0, 2, 3), keepdims=True)
    y = (conv - mean) * jax.lax.rsqrt(var + EPS)
    y = y * gamma.reshape(1, -1, 1, 1) + beta.reshape(1, -1, 1, 1)
    return jnp.maximum(y, 0.0)


if __name__ == "__main__":
    key = jax.random.PRNGKey(0)
    k_x, k_w, k_g, k_b = jax.random.split(key, 4)

    N, Cin, H, W = 2, 4, 16, 16
    Cout, KH, KW = 8, 3, 3

    x = jax.random.normal(k_x, (N, Cin, H, W), dtype=jnp.float32)
    weight = jax.random.normal(k_w, (Cout, Cin, KH, KW), dtype=jnp.float32) * 0.1
    gamma = 1.0 + 0.1 * jax.random.normal(k_g, (Cout,), dtype=jnp.float32)
    beta = 0.1 * jax.random.normal(k_b, (Cout,), dtype=jnp.float32)

    # stride-1, exact f32 path; max_tile_rows=4 forces a multi-tile grid (2x4).
    ref1 = _reference(x, weight, gamma, beta, stride=1, pad=1)
    out1 = basic_conv2d(x, weight, gamma, beta, stride=1, pad=1,
                        matmul_dtype=jnp.float32, max_tile_rows=4)
    out1 = jax.block_until_ready(out1)
    assert out1.shape == ref1.shape, (out1.shape, ref1.shape)
    assert jnp.allclose(out1, ref1, atol=2e-4, rtol=2e-4), \
        float(jnp.max(jnp.abs(out1 - ref1)))

    # stride-1, default bf16 MXU path (perf default on v5e/v6e/v7x),
    # whole-image row tiles, bf16 inter-pass intermediate.
    out1b = basic_conv2d(x, weight, gamma, beta, stride=1, pad=1)
    out1b = jax.block_until_ready(out1b)
    assert out1b.shape == ref1.shape
    assert jnp.allclose(out1b, ref1, atol=7.5e-2, rtol=7.5e-2), \
        float(jnp.max(jnp.abs(out1b - ref1)))

    # stride-2 (space-to-depth path), exact f32.
    ref2 = _reference(x, weight, gamma, beta, stride=2, pad=1)
    out2 = basic_conv2d(x, weight, gamma, beta, stride=2, pad=1,
                        matmul_dtype=jnp.float32)
    out2 = jax.block_until_ready(out2)
    assert out2.shape == ref2.shape, (out2.shape, ref2.shape)
    assert jnp.allclose(out2, ref2, atol=2e-4, rtol=2e-4), \
        float(jnp.max(jnp.abs(out2 - ref2)))

    print("KERNEL_OK")
</pallas_src>

<mosaic_0001>
module attributes {stable_mosaic.version = 11 : i64} {
  func.func @_conv_stats_kernel(%arg0: i32, %arg1: i32, %arg2: memref<1x18x18x4xf32, #tpu.memory_space<vmem>>, %arg3: memref<9x4x8xf32, #tpu.memory_space<vmem>>, %arg4: memref<1x4x16x8xf32, #tpu.memory_space<vmem>>, %arg5: memref<1x1x2x8xf32, #tpu.memory_space<vmem>>) attributes {dimension_semantics = [#tpu.dimension_semantics<parallel>, #tpu.dimension_semantics<parallel>], iteration_bounds = array<i64: 2, 4>, scalar_prefetch = 0 : i64, scratch_operands = 0 : i64, tpu.core_type = #tpu.core_type<tc>, window_params = [{transform_indices = @transform_0, window_bounds = array<i64: 1, 18, 18, 4>}, {pipeline_mode = #tpu.pipeline_mode<synchronous>, transform_indices = @transform_1, window_bounds = array<i64: 9, 4, 8>}, {transform_indices = @transform_2, window_bounds = array<i64: 1, 4, 16, 8>}, {transform_indices = @transform_3, window_bounds = array<i64: 1, 1, 2, 8>}]} {
    %c4_i32 = arith.constant 4 : i32
    %0 = arith.muli %arg1, %c4_i32 : i32
    %cst = arith.constant 0.000000e+00 : f32
    %1 = vector.broadcast %cst : f32 to vector<64x8xf32>
    %c0_i32 = arith.constant 0 : i32
    %2 = arith.addi %0, %c0_i32 : i32
    %c0 = arith.constant 0 : index
    %3 = arith.index_cast %2 : i32 to index
    %c0_0 = arith.constant 0 : index
    %c0_1 = arith.constant 0 : index
    %4 = vector.load %arg2[%c0, %3, %c0_0, %c0_1] : memref<1x18x18x4xf32, #tpu.memory_space<vmem>>, vector<1x4x16x4xf32>
    %5 = vector.shape_cast %4 : vector<1x4x16x4xf32> to vector<4x16x4xf32>
    %6 = vector.shape_cast %5 : vector<4x16x4xf32> to vector<64x4xf32>
    %c0_2 = arith.constant 0 : index
    %c0_3 = arith.constant 0 : index
    %c0_4 = arith.constant 0 : index
    %7 = vector.load %arg3[%c0_2, %c0_3, %c0_4] : memref<9x4x8xf32, #tpu.memory_space<vmem>>, vector<1x4x8xf32>
    %8 = vector.shape_cast %7 : vector<1x4x8xf32> to vector<4x8xf32>
    %cst_5 = arith.constant dense<0.000000e+00> : vector<64x8xf32>
    %9 = tpu.matmul %6, %8, %cst_5 {dimension_numbers = #tpu.dot_dimension_numbers<[1], [0], [0], [1], [0, 0, 1, 1], [], []>} : vector<64x4xf32>, vector<4x8xf32>, vector<64x8xf32> -> vector<64x8xf32>
    %10 = arith.addf %1, %9 : vector<64x8xf32>
    %c0_i32_6 = arith.constant 0 : i32
    %11 = arith.addi %0, %c0_i32_6 : i32
    %c0_7 = arith.constant 0 : index
    %12 = arith.index_cast %11 : i32 to index
    %c1 = arith.constant 1 : index
    %c0_8 = arith.constant 0 : index
    %13 = vector.load %arg2[%c0_7, %12, %c1, %c0_8] : memref<1x18x18x4xf32, #tpu.memory_space<vmem>>, vector<1x4x16x4xf32>
    %14 = vector.shape_cast %13 : vector<1x4x16x4xf32> to vector<4x16x4xf32>
    %15 = vector.shape_cast %14 : vector<4x16x4xf32> to vector<64x4xf32>
    %c1_9 = arith.constant 1 : index
    %c0_10 = arith.constant 0 : index
    %c0_11 = arith.constant 0 : index
    %16 = vector.load %arg3[%c1_9, %c0_10, %c0_11] : memref<9x4x8xf32, #tpu.memory_space<vmem>>, vector<1x4x8xf32>
    %17 = vector.shape_cast %16 : vector<1x4x8xf32> to vector<4x8xf32>
    %cst_12 = arith.constant dense<0.000000e+00> : vector<64x8xf32>
    %18 = tpu.matmul %15, %17, %cst_12 {dimension_numbers = #tpu.dot_dimension_numbers<[1], [0], [0], [1], [0, 0, 1, 1], [], []>} : vector<64x4xf32>, vector<4x8xf32>, vector<64x8xf32> -> vector<64x8xf32>
    %19 = arith.addf %10, %18 : vector<64x8xf32>
    %c0_i32_13 = arith.constant 0 : i32
    %20 = arith.addi %0, %c0_i32_13 : i32
    %c0_14 = arith.constant 0 : index
    %21 = arith.index_cast %20 : i32 to index
    %c2 = arith.constant 2 : index
    %c0_15 = arith.constant 0 : index
    %22 = vector.load %arg2[%c0_14, %21, %c2, %c0_15] : memref<1x18x18x4xf32, #tpu.memory_space<vmem>>, vector<1x4x16x4xf32>
    %23 = vector.shape_cast %22 : vector<1x4x16x4xf32> to vector<4x16x4xf32>
    %24 = vector.shape_cast %23 : vector<4x16x4xf32> to vector<64x4xf32>
    %c2_16 = arith.constant 2 : index
    %c0_17 = arith.constant 0 : index
    %c0_18 = arith.constant 0 : index
    %25 = vector.load %arg3[%c2_16, %c0_17, %c0_18] : memref<9x4x8xf32, #tpu.memory_space<vmem>>, vector<1x4x8xf32>
    %26 = vector.shape_cast %25 : vector<1x4x8xf32> to vector<4x8xf32>
    %cst_19 = arith.constant dense<0.000000e+00> : vector<64x8xf32>
    %27 = tpu.matmul %24, %26, %cst_19 {dimension_numbers = #tpu.dot_dimension_numbers<[1], [0], [0], [1], [0, 0, 1, 1], [], []>} : vector<64x4xf32>, vector<4x8xf32>, vector<64x8xf32> -> vector<64x8xf32>
    %28 = arith.addf %19, %27 : vector<64x8xf32>
    %c1_i32 = arith.constant 1 : i32
    %29 = arith.addi %0, %c1_i32 : i32
    %c0_20 = arith.constant 0 : index
    %30 = arith.index_cast %29 : i32 to index
    %c0_21 = arith.constant 0 : index
    %c0_22 = arith.constant 0 : index
    %31 = vector.load %arg2[%c0_20, %30, %c0_21, %c0_22] : memref<1x18x18x4xf32, #tpu.memory_space<vmem>>, vector<1x4x16x4xf32>
    %32 = vector.shape_cast %31 : vector<1x4x16x4xf32> to vector<4x16x4xf32>
    %33 = vector.shape_cast %32 : vector<4x16x4xf32> to vector<64x4xf32>
    %c3 = arith.constant 3 : index
    %c0_23 = arith.constant 0 : index
    %c0_24 = arith.constant 0 : index
    %34 = vector.load %arg3[%c3, %c0_23, %c0_24] : memref<9x4x8xf32, #tpu.memory_space<vmem>>, vector<1x4x8xf32>
    %35 = vector.shape_cast %34 : vector<1x4x8xf32> to vector<4x8xf32>
    %cst_25 = arith.constant dense<0.000000e+00> : vector<64x8xf32>
    %36 = tpu.matmul %33, %35, %cst_25 {dimension_numbers = #tpu.dot_dimension_numbers<[1], [0], [0], [1], [0, 0, 1, 1], [], []>} : vector<64x4xf32>, vector<4x8xf32>, vector<64x8xf32> -> vector<64x8xf32>
    %37 = arith.addf %28, %36 : vector<64x8xf32>
    %c1_i32_26 = arith.constant 1 : i32
    %38 = arith.addi %0, %c1_i32_26 : i32
    %c0_27 = arith.constant 0 : index
    %39 = arith.index_cast %38 : i32 to index
    %c1_28 = arith.constant 1 : index
    %c0_29 = arith.constant 0 : index
    %40 = vector.load %arg2[%c0_27, %39, %c1_28, %c0_29] : memref<1x18x18x4xf32, #tpu.memory_space<vmem>>, vector<1x4x16x4xf32>
    %41 = vector.shape_cast %40 : vector<1x4x16x4xf32> to vector<4x16x4xf32>
    %42 = vector.shape_cast %41 : vector<4x16x4xf32> to vector<64x4xf32>
    %c4 = arith.constant 4 : index
    %c0_30 = arith.constant 0 : index
    %c0_31 = arith.constant 0 : index
    %43 = vector.load %arg3[%c4, %c0_30, %c0_31] : memref<9x4x8xf32, #tpu.memory_space<vmem>>, vector<1x4x8xf32>
    %44 = vector.shape_cast %43 : vector<1x4x8xf32> to vector<4x8xf32>
    %cst_32 = arith.constant dense<0.000000e+00> : vector<64x8xf32>
    %45 = tpu.matmul %42, %44, %cst_32 {dimension_numbers = #tpu.dot_dimension_numbers<[1], [0], [0], [1], [0, 0, 1, 1], [], []>} : vector<64x4xf32>, vector<4x8xf32>, vector<64x8xf32> -> vector<64x8xf32>
    %46 = arith.addf %37, %45 : vector<64x8xf32>
    %c1_i32_33 = arith.constant 1 : i32
    %47 = arith.addi %0, %c1_i32_33 : i32
    %c0_34 = arith.constant 0 : index
    %48 = arith.index_cast %47 : i32 to index
    %c2_35 = arith.constant 2 : index
    %c0_36 = arith.constant 0 : index
    %49 = vector.load %arg2[%c0_34, %48, %c2_35, %c0_36] : memref<1x18x18x4xf32, #tpu.memory_space<vmem>>, vector<1x4x16x4xf32>
    %50 = vector.shape_cast %49 : vector<1x4x16x4xf32> to vector<4x16x4xf32>
    %51 = vector.shape_cast %50 : vector<4x16x4xf32> to vector<64x4xf32>
    %c5 = arith.constant 5 : index
    %c0_37 = arith.constant 0 : index
    %c0_38 = arith.constant 0 : index
    %52 = vector.load %arg3[%c5, %c0_37, %c0_38] : memref<9x4x8xf32, #tpu.memory_space<vmem>>, vector<1x4x8xf32>
    %53 = vector.shape_cast %52 : vector<1x4x8xf32> to vector<4x8xf32>
    %cst_39 = arith.constant dense<0.000000e+00> : vector<64x8xf32>
    %54 = tpu.matmul %51, %53, %cst_39 {dimension_numbers = #tpu.dot_dimension_numbers<[1], [0], [0], [1], [0, 0, 1, 1], [], []>} : vector<64x4xf32>, vector<4x8xf32>, vector<64x8xf32> -> vector<64x8xf32>
    %55 = arith.addf %46, %54 : vector<64x8xf32>
    %c2_i32 = arith.constant 2 : i32
    %56 = arith.addi %0, %c2_i32 : i32
    %c0_40 = arith.constant 0 : index
    %57 = arith.index_cast %56 : i32 to index
    %c0_41 = arith.constant 0 : index
    %c0_42 = arith.constant 0 : index
    %58 = vector.load %arg2[%c0_40, %57, %c0_41, %c0_42] : memref<1x18x18x4xf32, #tpu.memory_space<vmem>>, vector<1x4x16x4xf32>
    %59 = vector.shape_cast %58 : vector<1x4x16x4xf32> to vector<4x16x4xf32>
    %60 = vector.shape_cast %59 : vector<4x16x4xf32> to vector<64x4xf32>
    %c6 = arith.constant 6 : index
    %c0_43 = arith.constant 0 : index
    %c0_44 = arith.constant 0 : index
    %61 = vector.load %arg3[%c6, %c0_43, %c0_44] : memref<9x4x8xf32, #tpu.memory_space<vmem>>, vector<1x4x8xf32>
    %62 = vector.shape_cast %61 : vector<1x4x8xf32> to vector<4x8xf32>
    %cst_45 = arith.constant dense<0.000000e+00> : vector<64x8xf32>
    %63 = tpu.matmul %60, %62, %cst_45 {dimension_numbers = #tpu.dot_dimension_numbers<[1], [0], [0], [1], [0, 0, 1, 1], [], []>} : vector<64x4xf32>, vector<4x8xf32>, vector<64x8xf32> -> vector<64x8xf32>
    %64 = arith.addf %55, %63 : vector<64x8xf32>
    %c2_i32_46 = arith.constant 2 : i32
    %65 = arith.addi %0, %c2_i32_46 : i32
    %c0_47 = arith.constant 0 : index
    %66 = arith.index_cast %65 : i32 to index
    %c1_48 = arith.constant 1 : index
    %c0_49 = arith.constant 0 : index
    %67 = vector.load %arg2[%c0_47, %66, %c1_48, %c0_49] : memref<1x18x18x4xf32, #tpu.memory_space<vmem>>, vector<1x4x16x4xf32>
    %68 = vector.shape_cast %67 : vector<1x4x16x4xf32> to vector<4x16x4xf32>
    %69 = vector.shape_cast %68 : vector<4x16x4xf32> to vector<64x4xf32>
    %c7 = arith.constant 7 : index
    %c0_50 = arith.constant 0 : index
    %c0_51 = arith.constant 0 : index
    %70 = vector.load %arg3[%c7, %c0_50, %c0_51] : memref<9x4x8xf32, #tpu.memory_space<vmem>>, vector<1x4x8xf32>
    %71 = vector.shape_cast %70 : vector<1x4x8xf32> to vector<4x8xf32>
    %cst_52 = arith.constant dense<0.000000e+00> : vector<64x8xf32>
    %72 = tpu.matmul %69, %71, %cst_52 {dimension_numbers = #tpu.dot_dimension_numbers<[1], [0], [0], [1], [0, 0, 1, 1], [], []>} : vector<64x4xf32>, vector<4x8xf32>, vector<64x8xf32> -> vector<64x8xf32>
    %73 = arith.addf %64, %72 : vector<64x8xf32>
    %c2_i32_53 = arith.constant 2 : i32
    %74 = arith.addi %0, %c2_i32_53 : i32
    %c0_54 = arith.constant 0 : index
    %75 = arith.index_cast %74 : i32 to index
    %c2_55 = arith.constant 2 : index
    %c0_56 = arith.constant 0 : index
    %76 = vector.load %arg2[%c0_54, %75, %c2_55, %c0_56] : memref<1x18x18x4xf32, #tpu.memory_space<vmem>>, vector<1x4x16x4xf32>
    %77 = vector.shape_cast %76 : vector<1x4x16x4xf32> to vector<4x16x4xf32>
    %78 = vector.shape_cast %77 : vector<4x16x4xf32> to vector<64x4xf32>
    %c8 = arith.constant 8 : index
    %c0_57 = arith.constant 0 : index
    %c0_58 = arith.constant 0 : index
    %79 = vector.load %arg3[%c8, %c0_57, %c0_58] : memref<9x4x8xf32, #tpu.memory_space<vmem>>, vector<1x4x8xf32>
    %80 = vector.shape_cast %79 : vector<1x4x8xf32> to vector<4x8xf32>
    %cst_59 = arith.constant dense<0.000000e+00> : vector<64x8xf32>
    %81 = tpu.matmul %78, %80, %cst_59 {dimension_numbers = #tpu.dot_dimension_numbers<[1], [0], [0], [1], [0, 0, 1, 1], [], []>} : vector<64x4xf32>, vector<4x8xf32>, vector<64x8xf32> -> vector<64x8xf32>
    %82 = arith.addf %73, %81 : vector<64x8xf32>
    %83 = vector.shape_cast %82 : vector<64x8xf32> to vector<4x16x8xf32>
    %c0_60 = arith.constant 0 : index
    %c0_61 = arith.constant 0 : index
    %c0_62 = arith.constant 0 : index
    %c0_63 = arith.constant 0 : index
    %84 = vector.load %arg4[%c0_60, %c0_61, %c0_62, %c0_63] : memref<1x4x16x8xf32, #tpu.memory_space<vmem>>, vector<1x4x16x8xf32>
    %85 = vector.shape_cast %84 : vector<1x4x16x8xf32> to vector<4x16x8xf32>
    %86 = vector.shape_cast %83 : vector<4x16x8xf32> to vector<1x4x16x8xf32>
    tpu.vector_store %arg4[%c0_60, %c0_61, %c0_62, %c0_63], %86 {strides = array<i32>} : memref<1x4x16x8xf32, #tpu.memory_space<vmem>>, vector<1x4x16x8xf32>,
    %cst_64 = arith.constant dense<0.000000e+00> : vector<8xf32>
    %87 = vector.multi_reduction <add>, %82, %cst_64 [0] : vector<64x8xf32> to vector<8xf32>
    %88 = vector.shape_cast %87 : vector<8xf32> to vector<1x8xf32>
    %cst_65 = arith.constant 1.562500e-02 : f32
    %89 = vector.broadcast %cst_65 : f32 to vector<1x8xf32>
    %90 = arith.mulf %88, %89 : vector<1x8xf32>
    %91 = vector.broadcast %90 : vector<1x8xf32> to vector<64x8xf32>
    %92 = arith.subf %82, %91 : vector<64x8xf32>
    %c0_66 = arith.constant 0 : index
    %c0_67 = arith.constant 0 : index
    %c0_68 = arith.constant 0 : index
    %c0_69 = arith.constant 0 : index
    %93 = vector.load %arg5[%c0_66, %c0_67, %c0_68, %c0_69] : memref<1x1x2x8xf32, #tpu.memory_space<vmem>>, vector<1x1x1x8xf32>
    %94 = vector.shape_cast %93 : vector<1x1x1x8xf32> to vector<1x8xf32>
    %95 = vector.shape_cast %90 : vector<1x8xf32> to vector<1x1x1x8xf32>
    tpu.vector_store %arg5[%c0_66, %c0_67, %c0_68, %c0_69], %95 {strides = array<i32>} : memref<1x1x2x8xf32, #tpu.memory_space<vmem>>, vector<1x1x1x8xf32>,
    %96 = arith.mulf %92, %92 : vector<64x8xf32>
    %cst_70 = arith.constant dense<0.000000e+00> : vector<8xf32>
    %97 = vector.multi_reduction <add>, %96, %cst_70 [0] : vector<64x8xf32> to vector<8xf32>
    %98 = vector.shape_cast %97 : vector<8xf32> to vector<1x8xf32>
    %c0_71 = arith.constant 0 : index
    %c0_72 = arith.constant 0 : index
    %c1_73 = arith.constant 1 : index
    %c0_74 = arith.constant 0 : index
    %99 = vector.load %arg5[%c0_71, %c0_72, %c1_73, %c0_74] : memref<1x1x2x8xf32, #tpu.memory_space<vmem>>, vector<1x1x1x8xf32>
    %100 = vector.shape_cast %99 : vector<1x1x1x8xf32> to vector<1x8xf32>
    %101 = vector.shape_cast %98 : vector<1x8xf32> to vector<1x1x1x8xf32>
    tpu.vector_store %arg5[%c0_71, %c0_72, %c1_73, %c0_74], %101 {strides = array<i32>} : memref<1x1x2x8xf32, #tpu.memory_space<vmem>>, vector<1x1x1x8xf32>,
    return
  }
  func.func @transform_0(%arg0: i32, %arg1: i32) -> (i32, i32, i32, i32) {
    %c0_i32 = arith.constant 0 : i32
    %c0_i32_0 = arith.constant 0 : i32
    %c0_i32_1 = arith.constant 0 : i32
    %c0_i32_2 = arith.constant 0 : i32
    return %arg0, %c0_i32, %c0_i32_0, %c0_i32_1 : i32, i32, i32, i32
  }
  func.func @transform_1(%arg0: i32, %arg1: i32) -> (i32, i32, i32) {
    %c0_i32 = arith.constant 0 : i32
    %c0_i32_0 = arith.constant 0 : i32
    %c0_i32_1 = arith.constant 0 : i32
    %c0_i32_2 = arith.constant 0 : i32
    return %c0_i32, %c0_i32_0, %c0_i32_1 : i32, i32, i32
  }
  func.func @transform_2(%arg0: i32, %arg1: i32) -> (i32, i32, i32, i32) {
    %c0_i32 = arith.constant 0 : i32
    %c0_i32_0 = arith.constant 0 : i32
    %c0_i32_1 = arith.constant 0 : i32
    return %arg0, %arg1, %c0_i32, %c0_i32_0 : i32, i32, i32, i32
  }
  func.func @transform_3(%arg0: i32, %arg1: i32) -> (i32, i32, i32, i32) {
    %c0_i32 = arith.constant 0 : i32
    %c0_i32_0 = arith.constant 0 : i32
    %c0_i32_1 = arith.constant 0 : i32
    return %arg0, %arg1, %c0_i32, %c0_i32_0 : i32, i32, i32, i32
  }
}

module attributes {stable_mosaic.version = 11 : i64} {
  func.func @_bn_relu_kernel(%arg0: i32, %arg1: i32, %arg2: memref<1x4x16x8xf32, #tpu.memory_space<vmem>>, %arg3: memref<1x8xf32, #tpu.memory_space<vmem>>, %arg4: memref<1x8xf32, #tpu.memory_space<vmem>>, %arg5: memref<1x4x16x8xf32, #tpu.memory_space<vmem>>) attributes {dimension_semantics = [#tpu.dimension_semantics<parallel>, #tpu.dimension_semantics<parallel>], iteration_bounds = array<i64: 2, 4>, scalar_prefetch = 0 : i64, scratch_operands = 0 : i64, tpu.core_type = #tpu.core_type<tc>, window_params = [{transform_indices = @transform_0, window_bounds = array<i64: 1, 4, 16, 8>}, {pipeline_mode = #tpu.pipeline_mode<synchronous>, transform_indices = @transform_1, window_bounds = array<i64: 1, 8>}, {pipeline_mode = #tpu.pipeline_mode<synchronous>, transform_indices = @transform_2, window_bounds = array<i64: 1, 8>}, {transform_indices = @transform_3, window_bounds = array<i64: 1, 4, 16, 8>}]} {
    %c0 = arith.constant 0 : index
    %c0_0 = arith.constant 0 : index
    %c0_1 = arith.constant 0 : index
    %c0_2 = arith.constant 0 : index
    %0 = vector.load %arg2[%c0, %c0_0, %c0_1, %c0_2] : memref<1x4x16x8xf32, #tpu.memory_space<vmem>>, vector<1x4x16x8xf32>
    %1 = vector.shape_cast %0 : vector<1x4x16x8xf32> to vector<4x16x8xf32>
    %c0_3 = arith.constant 0 : index
    %c0_4 = arith.constant 0 : index
    %2 = vector.load %arg3[%c0_3, %c0_4] : memref<1x8xf32, #tpu.memory_space<vmem>>, vector<1x8xf32>
    %3 = vector.shape_cast %2 : vector<1x8xf32> to vector<1x1x8xf32>
    %4 = vector.broadcast %3 : vector<1x1x8xf32> to vector<4x16x8xf32>
    %5 = arith.mulf %1, %4 : vector<4x16x8xf32>
    %c0_5 = arith.constant 0 : index
    %c0_6 = arith.constant 0 : index
    %6 = vector.load %arg4[%c0_5, %c0_6] : memref<1x8xf32, #tpu.memory_space<vmem>>, vector<1x8xf32>
    %7 = vector.shape_cast %6 : vector<1x8xf32> to vector<1x1x8xf32>
    %8 = vector.broadcast %7 : vector<1x1x8xf32> to vector<4x16x8xf32>
    %9 = arith.addf %5, %8 : vector<4x16x8xf32>
    %cst = arith.constant 0.000000e+00 : f32
    %10 = vector.broadcast %cst : f32 to vector<4x16x8xf32>
    %11 = arith.maximumf %9, %10 : vector<4x16x8xf32>
    %c0_7 = arith.constant 0 : index
    %c0_8 = arith.constant 0 : index
    %c0_9 = arith.constant 0 : index
    %c0_10 = arith.constant 0 : index
    %12 = vector.load %arg5[%c0_7, %c0_8, %c0_9, %c0_10] : memref<1x4x16x8xf32, #tpu.memory_space<vmem>>, vector<1x4x16x8xf32>
    %13 = vector.shape_cast %12 : vector<1x4x16x8xf32> to vector<4x16x8xf32>
    %14 = vector.shape_cast %11 : vector<4x16x8xf32> to vector<1x4x16x8xf32>
    tpu.vector_store %arg5[%c0_7, %c0_8, %c0_9, %c0_10], %14 {strides = array<i32>} : memref<1x4x16x8xf32, #tpu.memory_space<vmem>>, vector<1x4x16x8xf32>,
    return
  }
  func.func @transform_0(%arg0: i32, %arg1: i32) -> (i32, i32, i32, i32) {
    %c0_i32 = arith.constant 0 : i32
    %c0_i32_0 = arith.constant 0 : i32
    %c0_i32_1 = arith.constant 0 : i32
    return %arg0, %arg1, %c0_i32, %c0_i32_0 : i32, i32, i32, i32
  }
  func.func @transform_1(%arg0: i32, %arg1: i32) -> (i32, i32) {
    %c0_i32 = arith.constant 0 : i32
    %c0_i32_0 = arith.constant 0 : i32
    %c0_i32_1 = arith.constant 0 : i32
    return %c0_i32, %c0_i32_0 : i32, i32
  }
  func.func @transform_2(%arg0: i32, %arg1: i32) -> (i32, i32) {
    %c0_i32 = arith.constant 0 : i32
    %c0_i32_0 = arith.constant 0 : i32
    %c0_i32_1 = arith.constant 0 : i32
    return %c0_i32, %c0_i32_0 : i32, i32
  }
  func.func @transform_3(%arg0: i32, %arg1: i32) -> (i32, i32, i32, i32) {
    %c0_i32 = arith.constant 0 : i32
    %c0_i32_0 = arith.constant 0 : i32
    %c0_i32_1 = arith.constant 0 : i32
    return %arg0, %arg1, %c0_i32, %c0_i32_0 : i32, i32, i32, i32
  }
}

</mosaic_0001>

<llo_original>
// kernel: _basic_conv2d_impl.3
$region0: #{_basic_conv2d_impl.3}
  #allocation0 [shape = 'u32[]', space=smem, size = 0x4, offset = 0x4, fixed_abs, tag = 'smem constant byte address 0x4 - core index']
  #allocation1 [shape = 'u32[72,128]{1,0:T(1,128)}', space=vmem, size = 0x9000, scoped, tag = 'internal scratch']
  %s0 = inlined_call_operand.vmem [shape: f32[2,16,16,8], index: 0, kind: input, shape index: {}]
  %s1 = inlined_call_operand.vmem [shape: f32[1,8], index: 1, kind: input, shape index: {}]
  %s2 = inlined_call_operand.vmem [shape: f32[1,8], index: 2, kind: input, shape index: {}]
  %s3 = inlined_call_operand.vmem [shape: f32[2,16,16,8], index: 3, kind: output, shape index: {}]
  %s4 = sld [smem:[#allocation0]]
  $region45: #{_basic_conv2d_impl.3} parent=0
    _
  %s6 = ssub.s32 1, %s4
  %s7 = scalar_select 0, %s6, %s4
  loop: start=0, step=1, limit=10
  $region2: #{_basic_conv2d_impl.3} parent=0 // loop_pre_header
    _
  $region3: #{_basic_conv2d_impl.3} parent=0 // loop_header
    %s9 = sphi 0, %s13
    %p10 = scmp.ge.s32.totalorder %s9, 10
    %s16 = sphi 0, %s28
    %s17 = sphi 0, %s24
    %s18 = sphi 0, %s16
    %s19 = sphi 0, %s17
    %s20 = sphi 0, %s18
    %s21 = sphi 0, %s19
    %s33 = sphi 0, %s35
    %s36 = sphi 0, %s33
    %s37 = sphi 0, %s36
    %s53 = sphi 0, %s37
    %s57 = sphi 0, %s57
    %s59 = sphi 0, %s57
    %s60 = sphi 0, %s59
    %s74 = sphi 0, %s60
    %s78 = sphi 0, %s78
    %s80 = sphi 0, %s78
    %s81 = sphi 0, %s80
    %s95 = sphi 0, %s81
    %s103 = sphi 0, %s105
    %s106 = sphi 0, %s103
    %s107 = sphi 0, %s106
    %s123 = sphi 0, %s107
  $region4: #{_basic_conv2d_impl.3} parent=0 // loop_header_branch
    %12 = sbr.rel (%p10) target = $region8
  $region5: #{_basic_conv2d_impl.3} parent=0 // loop_body
    %s14 = ssub.s32 %s9, 1
    %s15 = ssub.s32 %s9, 2
    %s22 = sadd.s32 1, %s17
    %p23 = scmp.ge.s32.totalorder %s22, 4
    %s24 = scalar_select %p23, 0, %s22
    %s25 = sadd.s32 1, %s16
    %s26 = scalar_select %p23, %s25, %s16
    %p27 = scmp.ge.s32.totalorder %s26, 2
    %s28 = scalar_select %p27, 0, %s26
    %s29 = ssub.s32 %s16, %s28
    %s30 = ssub.s32 %s17, %s24
    %s31 = sor.u32 %s29, %s30
    %p32 = scmp.eq.s32.totalorder %s31, 0
    %s34 = sadd.s32 %s33, 1
    %s35 = scalar_select %p32, %s33, %s34
    %p38 = pneg %p32
    %p39 = scmp.eq.s32.totalorder %s9, 7
    %p40 = por %p38, %p39
    %p41 = scmp.ne.s32.totalorder %s33, %s36
    %p42 = scmp.eq.s32.totalorder %s9, 0
    %p43 = por %p41, %p42
    %p44 = scmp.ne.s32.totalorder %s33, %s36
    %p45 = scmp.eq.s32.totalorder %s14, 7
    %p46 = por %p44, %p45
    %p47 = scmp.ne.s32.totalorder %s36, %s37
    %p48 = scmp.eq.s32.totalorder %s14, 0
    %p49 = por %p47, %p48
    %p50 = scmp.ne.s32.totalorder %s36, %s37
    %p51 = scmp.eq.s32.totalorder %s15, 7
    %p52 = por %p50, %p51
    %p54 = scmp.ne.s32.totalorder %s37, %s53
    %p55 = scmp.eq.s32.totalorder %s15, 0
    %p56 = por %p54, %p55
    %s58 = sadd.s32 %s57, 1
    %p61 = scmp.eq.s32.totalorder %s9, 7
    %p62 = scmp.ne.s32.totalorder %s57, %s59
    %p63 = scmp.eq.s32.totalorder %s9, 0
    %p64 = por %p62, %p63
    %p65 = scmp.ne.s32.totalorder %s57, %s59
    %p66 = scmp.eq.s32.totalorder %s14, 7
    %p67 = por %p65, %p66
    %p68 = scmp.ne.s32.totalorder %s59, %s60
    %p69 = scmp.eq.s32.totalorder %s14, 0
    %p70 = por %p68, %p69
    %p71 = scmp.ne.s32.totalorder %s59, %s60
    %p72 = scmp.eq.s32.totalorder %s15, 7
    %p73 = por %p71, %p72
    %p75 = scmp.ne.s32.totalorder %s60, %s74
    %p76 = scmp.eq.s32.totalorder %s15, 0
    %p77 = por %p75, %p76
    %s79 = sadd.s32 %s78, 1
    %p82 = scmp.eq.s32.totalorder %s9, 7
    %p83 = scmp.ne.s32.totalorder %s78, %s80
    %p84 = scmp.eq.s32.totalorder %s9, 0
    %p85 = por %p83, %p84
    %p86 = scmp.ne.s32.totalorder %s78, %s80
    %p87 = scmp.eq.s32.totalorder %s14, 7
    %p88 = por %p86, %p87
    %p89 = scmp.ne.s32.totalorder %s80, %s81
    %p90 = scmp.eq.s32.totalorder %s14, 0
    %p91 = por %p89, %p90
    %p92 = scmp.ne.s32.totalorder %s80, %s81
    %p93 = scmp.eq.s32.totalorder %s15, 7
    %p94 = por %p92, %p93
    %p96 = scmp.ne.s32.totalorder %s81, %s95
    %p97 = scmp.eq.s32.totalorder %s15, 0
    %p98 = por %p96, %p97
    %s99 = ssub.s32 %s16, %s28
    %s100 = ssub.s32 %s17, %s24
    %s101 = sor.u32 %s99, %s100
    %p102 = scmp.eq.s32.totalorder %s101, 0
    %s104 = sadd.s32 %s103, 1
    %s105 = scalar_select %p102, %s103, %s104
    %p108 = pneg %p102
    %p109 = scmp.eq.s32.totalorder %s9, 7
    %p110 = por %p108, %p109
    %p111 = scmp.ne.s32.totalorder %s103, %s106
    %p112 = scmp.eq.s32.totalorder %s9, 0
    %p113 = por %p111, %p112
    %p114 = scmp.ne.s32.totalorder %s103, %s106
    %p115 = scmp.eq.s32.totalorder %s14, 7
    %p116 = por %p114, %p115
    %p117 = scmp.ne.s32.totalorder %s106, %s107
    %p118 = scmp.eq.s32.totalorder %s14, 0
    %p119 = por %p117, %p118
    %p120 = scmp.ne.s32.totalorder %s106, %s107
    %p121 = scmp.eq.s32.totalorder %s15, 7
    %p122 = por %p120, %p121
    %p124 = scmp.ne.s32.totalorder %s107, %s123
    %p125 = scmp.eq.s32.totalorder %s15, 0
    %p126 = por %p124, %p125
    %p127 = scmp.le.s32.totalorder 1, %s9
    %p128 = scmp.lt.s32.totalorder %s9, 9
    %p129 = pnand %p127, %p128
    %p130 = pneg %p129
    // Predicated region
    $region9: #{_basic_conv2d_impl.3} parent=5 // pred_check
      _
    $region10: #{_basic_conv2d_impl.3} parent=5 // pred_check_branch
      %132 = sbr.rel (%p129) target = $region12
    $region11: #{_basic_conv2d_impl.3} parent=5 // pred_region
      %s133 = ssub.s32 %s9, 1
      // Predicated region
      $region13: #{_basic_conv2d_impl.3} parent=11 // pred_check
        %p134 = pneg %p70
      $region14: #{_basic_conv2d_impl.3} parent=11 // pred_check_branch
        %136 = sbr.rel (%p134) target = $region16
      $region15: #{_basic_conv2d_impl.3} parent=11 // pred_region
        _
      $region16: #{_basic_conv2d_impl.3} parent=11 // pred_fallthru
        _
      // Predicated region
      $region17: #{_basic_conv2d_impl.3} parent=11 // pred_check
        %p137 = pneg %p91
      $region18: #{_basic_conv2d_impl.3} parent=11 // pred_check_branch
        %139 = sbr.rel (%p137) target = $region20
      $region19: #{_basic_conv2d_impl.3} parent=11 // pred_region
        _
      $region20: #{_basic_conv2d_impl.3} parent=11 // pred_fallthru
        _
    $region12: #{_basic_conv2d_impl.3} parent=5 // pred_fallthru
      _
    %p140 = scmp.lt.s32.totalorder %s9, 8
    // Predicated region
    $region21: #{_basic_conv2d_impl.3} parent=5 // pred_check
      %p141 = pneg %p140
    $region22: #{_basic_conv2d_impl.3} parent=5 // pred_check_branch
      %143 = sbr.rel (%p141) target = $region24
    $region23: #{_basic_conv2d_impl.3} parent=5 // pred_region
      // Predicated region
      $region25: #{_basic_conv2d_impl.3} parent=23 // pred_check
        %p144 = pneg %p43
      $region26: #{_basic_conv2d_impl.3} parent=23 // pred_check_branch
        %146 = sbr.rel (%p144) target = $region28
      $region27: #{_basic_conv2d_impl.3} parent=23 // pred_region
        %s147 = smul.u32 4, %s17
        %p148 = scmp.lt.s32.totalorder %s16, 1
        %s149 = scalar_select %p148, %s16, 1
        %p150 = scmp.lt.s32.totalorder %s147, 15
        %s151 = scalar_select %p150, %s147, 15
        %s152 = smul.addr %s151, 2
        %s153 = smul.addr %s149, 32
        %s154 = sadd.s32 %s152, %s153
        %s155 = smul.addr %s154, 8
        %s156 = scalar_lea.vmem %s0, %s155
        %s157 = smul.u32 4, %s17
      $region28: #{_basic_conv2d_impl.3} parent=23 // pred_fallthru
        _
    $region24: #{_basic_conv2d_impl.3} parent=5 // pred_fallthru
      _
    %p158 = scmp.le.s32.totalorder 1, %s9
    %p159 = scmp.lt.s32.totalorder %s9, 9
    %p160 = pnand %p158, %p159
    %p161 = pneg %p160
    // Predicated region
    $region29: #{_basic_conv2d_impl.3} parent=5 // pred_check
      _
    $region30: #{_basic_conv2d_impl.3} parent=5 // pred_check_branch
      %163 = sbr.rel (%p160) target = $region32
    $region31: #{_basic_conv2d_impl.3} parent=5 // pred_region
      %s164 = ssub.s32 %s9, 1
      %s165 = smul.u32 4, %s19
      %p166 = scmp.lt.s32.totalorder %s18, 1
      %s167 = scalar_select %p166, %s18, 1
      %p168 = scmp.lt.s32.totalorder %s165, 15
      %s169 = scalar_select %p168, %s165, 15
      %s170 = smul.addr %s169, 2
      %s171 = smul.addr %s167, 32
      %s172 = sadd.s32 %s170, %s171
      %s173 = smul.addr %s172, 8
      %s174 = scalar_lea.vmem %s0, %s173
      %p175 = pneg %p49
      %p176 = pneg %p46
      %p177 = pneg %p70
      %p178 = pneg %p67
      %p179 = pneg %p91
      %p180 = pneg %p88
      %p181 = pneg %p119
      %p182 = pneg %p116
      %s183 = smul.u32 4, %s19
      %p184 = scmp.lt.s32.totalorder %s18, 1
      %s185 = scalar_select %p184, %s18, 1
      %p186 = scmp.lt.s32.totalorder %s183, 15
      %s187 = scalar_select %p186, %s183, 15
      %s188 = smul.addr %s187, 2
      %s189 = smul.addr %s185, 32
      %s190 = sadd.s32 %s188, %s189
      %s191 = smul.addr %s190, 8
      %s192 = scalar_lea.vmem %s3, %s191
      %s193 = smul.u32 4, %s19
      %p194 = scmp.lt.s32.totalorder %s18, 1
      %s195 = scalar_select %p194, %s18, 1
      %p196 = scmp.lt.s32.totalorder %s193, 15
      %s197 = scalar_select %p196, %s193, 15
      %s198 = smul.addr %s197, 2
      %s199 = smul.addr %s195, 32
      %s200 = sadd.s32 %s198, %s199
      %s201 = smul.addr %s200, 8
      %s202 = scalar_lea.vmem %s0, %s201
      %s203 = smul.u32 4, %s19
      %s204 = smul.u32 4, %s19
      %p205 = scmp.lt.s32.totalorder %s18, 1
      %s206 = scalar_select %p205, %s18, 1
      %p207 = scmp.lt.s32.totalorder %s204, 15
      %s208 = scalar_select %p207, %s204, 15
      %s209 = smul.addr %s208, 2
      %s210 = smul.addr %s206, 32
      %s211 = sadd.s32 %s209, %s210
      %s212 = smul.addr %s211, 8
      %s213 = scalar_lea.vmem %s3, %s212
      %s214 = smul.u32 4, %s19
      %v215 = vld [vmem:[%s202] sm:$0xff]
      %v216 = vld [vmem:[%s202 + $0x8] sm:$0xff]
      %v217 = vld [vmem:[%s202 + $0x10] sm:$0xff]
      %v218 = vld [vmem:[%s202 + $0x18] sm:$0xff]
      %v219 = vld [vmem:[%s202 + $0x20] sm:$0xff]
      %v220 = vld [vmem:[%s202 + $0x28] sm:$0xff]
      %v221 = vld [vmem:[%s202 + $0x30] sm:$0xff]
      %v222 = vld [vmem:[%s202 + $0x38] sm:$0xff]
      %v223 = vld [vmem:[%s1] sm:$0x1]
      %v225 = vperm.slane %v223, 0
      %v227 = vmul.f32 %v215, %v225
      %v228 = vmul.f32 %v216, %v225
      %v229 = vmul.f32 %v217, %v225
      %v230 = vmul.f32 %v218, %v225
      %v231 = vmul.f32 %v219, %v225
      %v232 = vmul.f32 %v220, %v225
      %v233 = vmul.f32 %v221, %v225
      %v234 = vmul.f32 %v222, %v225
      %v235 = vld [vmem:[%s2] sm:$0x1]
      %v237 = vperm.slane %v235, 0
      %v239 = vadd.f32 %v227, %v237
      %v240 = vadd.f32 %v228, %v237
      %v241 = vadd.f32 %v229, %v237
      %v242 = vadd.f32 %v230, %v237
      %v243 = vadd.f32 %v231, %v237
      %v244 = vadd.f32 %v232, %v237
      %v245 = vadd.f32 %v233, %v237
      %v246 = vadd.f32 %v234, %v237
      %v247 = vmax.f32 %v239, 0.0
      %v248 = vmax.f32 %v240, 0.0
      %v249 = vmax.f32 %v241, 0.0
      %v250 = vmax.f32 %v242, 0.0
      %v251 = vmax.f32 %v243, 0.0
      %v252 = vmax.f32 %v244, 0.0
      %v253 = vmax.f32 %v245, 0.0
      %v254 = vmax.f32 %v246, 0.0
      %vm255 = vcmask 64512
      %256 = vst.msk [vmem:[%s213] sm:$0xff] %vm255, %v247
      %257 = vst.msk [vmem:[%s213 + $0x8] sm:$0xff] %vm255, %v248
      %258 = vst.msk [vmem:[%s213 + $0x10] sm:$0xff] %vm255, %v249
      %259 = vst.msk [vmem:[%s213 + $0x18] sm:$0xff] %vm255, %v250
      %260 = vst.msk [vmem:[%s213 + $0x20] sm:$0xff] %vm255, %v251
      %261 = vst.msk [vmem:[%s213 + $0x28] sm:$0xff] %vm255, %v252
      %262 = vst.msk [vmem:[%s213 + $0x30] sm:$0xff] %vm255, %v253
      %263 = vst.msk [vmem:[%s213 + $0x38] sm:$0xff] %vm255, %v254
      %s264 = smul.u32 4, %s19
      %p265 = scmp.lt.s32.totalorder %s18, 1
      %s266 = scalar_select %p265, %s18, 1
      %p267 = scmp.lt.s32.totalorder %s264, 15
      %s268 = scalar_select %p267, %s264, 15
      %s269 = smul.addr %s268, 2
      %s270 = smul.addr %s266, 32
      %s271 = sadd.s32 %s269, %s270
      %s272 = smul.addr %s271, 8
      %s273 = scalar_lea.vmem %s3, %s272
      // Predicated region
      $region33: #{_basic_conv2d_impl.3} parent=31 // pred_check
        %p274 = pneg %p116
      $region34: #{_basic_conv2d_impl.3} parent=31 // pred_check_branch
        %276 = sbr.rel (%p274) target = $region36
      $region35: #{_basic_conv2d_impl.3} parent=31 // pred_region
        %s277 = smul.u32 4, %s19
      $region36: #{_basic_conv2d_impl.3} parent=31 // pred_fallthru
        _
    $region32: #{_basic_conv2d_impl.3} parent=5 // pred_fallthru
      _
    %p278 = scmp.le.s32.totalorder 2, %s9
    // Predicated region
    $region37: #{_basic_conv2d_impl.3} parent=5 // pred_check
      %p279 = pneg %p278
    $region38: #{_basic_conv2d_impl.3} parent=5 // pred_check_branch
      %281 = sbr.rel (%p279) target = $region40
    $region39: #{_basic_conv2d_impl.3} parent=5 // pred_region
      %s282 = ssub.s32 %s9, 2
      // Predicated region
      $region41: #{_basic_conv2d_impl.3} parent=39 // pred_check
        %p283 = pneg %p122
      $region42: #{_basic_conv2d_impl.3} parent=39 // pred_check_branch
        %285 = sbr.rel (%p283) target = $region44
      $region43: #{_basic_conv2d_impl.3} parent=39 // pred_region
        %s286 = smul.u32 4, %s21
        %p287 = scmp.lt.s32.totalorder %s20, 1
        %s288 = scalar_select %p287, %s20, 1
        %p289 = scmp.lt.s32.totalorder %s286, 15
        %s290 = scalar_select %p289, %s286, 15
        %s291 = smul.addr %s290, 2
        %s292 = smul.addr %s288, 32
        %s293 = sadd.s32 %s291, %s292
        %s294 = smul.addr %s293, 8
        %s295 = scalar_lea.vmem %s3, %s294
      $region44: #{_basic_conv2d_impl.3} parent=39 // pred_fallthru
        _
    $region40: #{_basic_conv2d_impl.3} parent=5 // pred_fallthru
      _
  $region6: #{_basic_conv2d_impl.3} parent=0 // loop_footer
    %s13 = sadd.s32 1, %s9
  $region7: #{_basic_conv2d_impl.3} parent=0 // loop_footer_branch
    %8 = sbr.rel target = $region3
  $region8: #{_basic_conv2d_impl.3} parent=0 // loop_exit
    _

// kernel: _basic_conv2d_impl.2
$region0: #{_basic_conv2d_impl.2}
  #allocation0 [shape = 'u32[]', space=smem, size = 0x4, offset = 0x4, fixed_abs, tag = 'smem constant byte address 0x4 - core index']
  #allocation1 [shape = 'u32[72,128]{1,0:T(1,128)}', space=vmem, size = 0x9000, scoped, tag = 'internal scratch']
  %s0 = inlined_call_operand.vmem [shape: f32[2,18,18,4], index: 0, kind: input, shape index: {}]
  %s1 = inlined_call_operand.vmem [shape: f32[9,4,8], index: 1, kind: input, shape index: {}]
  %s2 = inlined_call_operand.vmem [shape: f32[2,16,16,8], index: 2, kind: output, shape index: {0}]
  %s3 = inlined_call_operand.vmem [shape: f32[2,4,2,8], index: 3, kind: output, shape index: {1}]
  %4 = xla_tuple %s2, %s3
  %s5 = sld [smem:[#allocation0]]
  $region49: #{_basic_conv2d_impl.2} parent=0
    _
  %s7 = ssub.s32 1, %s5
  %s8 = scalar_select 0, %s7, %s5
  loop: start=0, step=1, limit=10
  $region2: #{_basic_conv2d_impl.2} parent=0 // loop_pre_header
    _
  $region3: #{_basic_conv2d_impl.2} parent=0 // loop_header
    %s10 = sphi 0, %s14
    %p11 = scmp.ge.s32.totalorder %s10, 10
    %s17 = sphi 0, %s29
    %s18 = sphi 0, %s25
    %s19 = sphi 0, %s17
    %s20 = sphi 0, %s18
    %s21 = sphi 0, %s19
    %s22 = sphi 0, %s20
    %s32 = sphi 0, %s34
    %s35 = sphi 0, %s32
    %s36 = sphi 0, %s35
    %s52 = sphi 0, %s36
    %s56 = sphi 0, %s56
    %s58 = sphi 0, %s56
    %s59 = sphi 0, %s58
    %s73 = sphi 0, %s59
    %s81 = sphi 0, %s83
    %s84 = sphi 0, %s81
    %s85 = sphi 0, %s84
    %s101 = sphi 0, %s85
    %s109 = sphi 0, %s111
    %s112 = sphi 0, %s109
    %s113 = sphi 0, %s112
    %s129 = sphi 0, %s113
  $region4: #{_basic_conv2d_impl.2} parent=0 // loop_header_branch
    %13 = sbr.rel (%p11) target = $region8
  $region5: #{_basic_conv2d_impl.2} parent=0 // loop_body
    %s15 = ssub.s32 %s10, 1
    %s16 = ssub.s32 %s10, 2
    %s23 = sadd.s32 1, %s18
    %p24 = scmp.ge.s32.totalorder %s23, 4
    %s25 = scalar_select %p24, 0, %s23
    %s26 = sadd.s32 1, %s17
    %s27 = scalar_select %p24, %s26, %s17
    %p28 = scmp.ge.s32.totalorder %s27, 2
    %s29 = scalar_select %p28, 0, %s27
    %s30 = ssub.s32 %s17, %s29
    %p31 = scmp.eq.s32.totalorder %s30, 0
    %s33 = sadd.s32 %s32, 1
    %s34 = scalar_select %p31, %s32, %s33
    %p37 = pneg %p31
    %p38 = scmp.eq.s32.totalorder %s10, 7
    %p39 = por %p37, %p38
    %p40 = scmp.ne.s32.totalorder %s32, %s35
    %p41 = scmp.eq.s32.totalorder %s10, 0
    %p42 = por %p40, %p41
    %p43 = scmp.ne.s32.totalorder %s32, %s35
    %p44 = scmp.eq.s32.totalorder %s15, 7
    %p45 = por %p43, %p44
    %p46 = scmp.ne.s32.totalorder %s35, %s36
    %p47 = scmp.eq.s32.totalorder %s15, 0
    %p48 = por %p46, %p47
    %p49 = scmp.ne.s32.totalorder %s35, %s36
    %p50 = scmp.eq.s32.totalorder %s16, 7
    %p51 = por %p49, %p50
    %p53 = scmp.ne.s32.totalorder %s36, %s52
    %p54 = scmp.eq.s32.totalorder %s16, 0
    %p55 = por %p53, %p54
    %s57 = sadd.s32 %s56, 1
    %p60 = scmp.eq.s32.totalorder %s10, 7
    %p61 = scmp.ne.s32.totalorder %s56, %s58
    %p62 = scmp.eq.s32.totalorder %s10, 0
    %p63 = por %p61, %p62
    %p64 = scmp.ne.s32.totalorder %s56, %s58
    %p65 = scmp.eq.s32.totalorder %s15, 7
    %p66 = por %p64, %p65
    %p67 = scmp.ne.s32.totalorder %s58, %s59
    %p68 = scmp.eq.s32.totalorder %s15, 0
    %p69 = por %p67, %p68
    %p70 = scmp.ne.s32.totalorder %s58, %s59
    %p71 = scmp.eq.s32.totalorder %s16, 7
    %p72 = por %p70, %p71
    %p74 = scmp.ne.s32.totalorder %s59, %s73
    %p75 = scmp.eq.s32.totalorder %s16, 0
    %p76 = por %p74, %p75
    %s77 = ssub.s32 %s17, %s29
    %s78 = ssub.s32 %s18, %s25
    %s79 = sor.u32 %s77, %s78
    %p80 = scmp.eq.s32.totalorder %s79, 0
    %s82 = sadd.s32 %s81, 1
    %s83 = scalar_select %p80, %s81, %s82
    %p86 = pneg %p80
    %p87 = scmp.eq.s32.totalorder %s10, 7
    %p88 = por %p86, %p87
    %p89 = scmp.ne.s32.totalorder %s81, %s84
    %p90 = scmp.eq.s32.totalorder %s10, 0
    %p91 = por %p89, %p90
    %p92 = scmp.ne.s32.totalorder %s81, %s84
    %p93 = scmp.eq.s32.totalorder %s15, 7
    %p94 = por %p92, %p93
    %p95 = scmp.ne.s32.totalorder %s84, %s85
    %p96 = scmp.eq.s32.totalorder %s15, 0
    %p97 = por %p95, %p96
    %p98 = scmp.ne.s32.totalorder %s84, %s85
    %p99 = scmp.eq.s32.totalorder %s16, 7
    %p100 = por %p98, %p99
    %p102 = scmp.ne.s32.totalorder %s85, %s101
    %p103 = scmp.eq.s32.totalorder %s16, 0
    %p104 = por %p102, %p103
    %s105 = ssub.s32 %s17, %s29
    %s106 = ssub.s32 %s18, %s25
    %s107 = sor.u32 %s105, %s106
    %p108 = scmp.eq.s32.totalorder %s107, 0
    %s110 = sadd.s32 %s109, 1
    %s111 = scalar_select %p108, %s109, %s110
    %p114 = pneg %p108
    %p115 = scmp.eq.s32.totalorder %s10, 7
    %p116 = por %p114, %p115
    %p117 = scmp.ne.s32.totalorder %s109, %s112
    %p118 = scmp.eq.s32.totalorder %s10, 0
    %p119 = por %p117, %p118
    %p120 = scmp.ne.s32.totalorder %s109, %s112
    %p121 = scmp.eq.s32.totalorder %s15, 7
    %p122 = por %p120, %p121
    %p123 = scmp.ne.s32.totalorder %s112, %s113
    %p124 = scmp.eq.s32.totalorder %s15, 0
    %p125 = por %p123, %p124
    %p126 = scmp.ne.s32.totalorder %s112, %s113
    %p127 = scmp.eq.s32.totalorder %s16, 7
    %p128 = por %p126, %p127
    %p130 = scmp.ne.s32.totalorder %s113, %s129
    %p131 = scmp.eq.s32.totalorder %s16, 0
    %p132 = por %p130, %p131
    %p133 = scmp.le.s32.totalorder 1, %s10
    %p134 = scmp.lt.s32.totalorder %s10, 9
    %p135 = pnand %p133, %p134
    %p136 = pneg %p135
    // Predicated region
    $region9: #{_basic_conv2d_impl.2} parent=5 // pred_check
      _
    $region10: #{_basic_conv2d_impl.2} parent=5 // pred_check_branch
      %138 = sbr.rel (%p135) target = $region12
    $region11: #{_basic_conv2d_impl.2} parent=5 // pred_region
      %s139 = ssub.s32 %s10, 1
      // Predicated region
      $region13: #{_basic_conv2d_impl.2} parent=11 // pred_check
        %p140 = pneg %p69
      $region14: #{_basic_conv2d_impl.2} parent=11 // pred_check_branch
        %142 = sbr.rel (%p140) target = $region16
      $region15: #{_basic_conv2d_impl.2} parent=11 // pred_region
        _
      $region16: #{_basic_conv2d_impl.2} parent=11 // pred_fallthru
        _
    $region12: #{_basic_conv2d_impl.2} parent=5 // pred_fallthru
      _
    %p143 = scmp.lt.s32.totalorder %s10, 8
    // Predicated region
    $region17: #{_basic_conv2d_impl.2} parent=5 // pred_check
      %p144 = pneg %p143
    $region18: #{_basic_conv2d_impl.2} parent=5 // pred_check_branch
      %146 = sbr.rel (%p144) target = $region20
    $region19: #{_basic_conv2d_impl.2} parent=5 // pred_region
      // Predicated region
      $region21: #{_basic_conv2d_impl.2} parent=19 // pred_check
        %p147 = pneg %p42
      $region22: #{_basic_conv2d_impl.2} parent=19 // pred_check_branch
        %149 = sbr.rel (%p147) target = $region24
      $region23: #{_basic_conv2d_impl.2} parent=19 // pred_region
        %p150 = scmp.lt.s32.totalorder %s17, 1
        %s151 = scalar_select %p150, %s17, 1
        %s152 = smul.addr %s151, 54
        %s153 = smul.addr %s152, 8
        %s154 = scalar_lea.vmem %s0, %s153
      $region24: #{_basic_conv2d_impl.2} parent=19 // pred_fallthru
        _
    $region20: #{_basic_conv2d_impl.2} parent=5 // pred_fallthru
      _
    %p155 = scmp.le.s32.totalorder 1, %s10
    %p156 = scmp.lt.s32.totalorder %s10, 9
    %p157 = pnand %p155, %p156
    %p158 = pneg %p157
    // Predicated region
    $region25: #{_basic_conv2d_impl.2} parent=5 // pred_check
      _
    $region26: #{_basic_conv2d_impl.2} parent=5 // pred_check_branch
      %160 = sbr.rel (%p157) target = $region28
    $region27: #{_basic_conv2d_impl.2} parent=5 // pred_region
      %s161 = ssub.s32 %s10, 1
      %p162 = scmp.lt.s32.totalorder %s19, 1
      %s163 = scalar_select %p162, %s19, 1
      %s164 = smul.addr %s163, 54
      %s165 = smul.addr %s164, 8
      %s166 = scalar_lea.vmem %s0, %s165
      %p167 = pneg %p48
      %p168 = pneg %p45
      %p169 = pneg %p69
      %p170 = pneg %p66
      %p171 = pneg %p97
      %p172 = pneg %p94
      %s173 = smul.u32 4, %s20
      %p174 = scmp.lt.s32.totalorder %s19, 1
      %s175 = scalar_select %p174, %s19, 1
      %p176 = scmp.lt.s32.totalorder %s173, 15
      %s177 = scalar_select %p176, %s173, 15
      %s178 = smul.addr %s177, 2
      %s179 = smul.addr %s175, 32
      %s180 = sadd.s32 %s178, %s179
      %s181 = smul.addr %s180, 8
      %s182 = scalar_lea.vmem %s2, %s181
      %p183 = pneg %p125
      %p184 = pneg %p122
      %p185 = scmp.lt.s32.totalorder %s19, 1
      %s186 = scalar_select %p185, %s19, 1
      %p187 = scmp.lt.s32.totalorder %s20, 3
      %s188 = scalar_select %p187, %s20, 3
      %s189 = smul.addr %s186, 4
      %s190 = sadd.s32 %s188, %s189
      %s191 = smul.addr %s190, 2
      %s192 = scalar_lea.vmem %s3, %s191
      %p193 = scmp.lt.s32.totalorder %s19, 1
      %s194 = scalar_select %p193, %s19, 1
      %s195 = smul.addr %s194, 54
      %s196 = smul.addr %s195, 8
      %s197 = scalar_lea.vmem %s0, %s196
      %s198 = smul.u32 4, %s20
      %p199 = scmp.lt.s32.totalorder %s19, 1
      %s200 = scalar_select %p199, %s19, 1
      %p201 = scmp.lt.s32.totalorder %s198, 15
      %s202 = scalar_select %p201, %s198, 15
      %s203 = smul.addr %s202, 2
      %s204 = smul.addr %s200, 32
      %s205 = sadd.s32 %s203, %s204
      %s206 = smul.addr %s205, 8
      %s207 = scalar_lea.vmem %s2, %s206
      %s208 = smul.u32 4, %s20
      %p209 = scmp.lt.s32.totalorder %s19, 1
      %s210 = scalar_select %p209, %s19, 1
      %p211 = scmp.lt.s32.totalorder %s20, 3
      %s212 = scalar_select %p211, %s20, 3
      %s213 = smul.addr %s210, 4
      %s214 = sadd.s32 %s212, %s213
      %s215 = smul.addr %s214, 2
      %s216 = scalar_lea.vmem %s3, %s215
      %s217 = smul.u32 %s20, 4
      %s218 = smul.u32 %s217, 24
      %s219 = scalar_lea.vmem %s197, %s218
      %v220 = vld [vmem:[%s219] sm:$0xff]
      %v221 = vld [vmem:[%s219 + $0x8] sm:$0xff]
      %v222 = vld [vmem:[%s219 + $0x18] sm:$0xff]
      %v223 = vld [vmem:[%s219 + $0x20] sm:$0xff]
      %v224 = vld [vmem:[%s219 + $0x30] sm:$0xff]
      %v225 = vld [vmem:[%s219 + $0x38] sm:$0xff]
      %v226 = vld [vmem:[%s219 + $0x48] sm:$0xff]
      %v227 = vld [vmem:[%s219 + $0x50] sm:$0xff]
      %v228 = vld [vmem:[%s1] sm:$0xf]
      %v229 = vld [vmem:[%s219 + $0x1] sm:$0xff]
      %v230 = vld [vmem:[%s219 + $0x9] sm:$0xff]
      %v231 = vld [vmem:[%s219 + $0x19] sm:$0xff]
      %v232 = vld [vmem:[%s219 + $0x21] sm:$0xff]
      %v233 = vld [vmem:[%s219 + $0x31] sm:$0xff]
      %v234 = vld [vmem:[%s219 + $0x39] sm:$0xff]
      %v235 = vld [vmem:[%s219 + $0x49] sm:$0xff]
      %v236 = vld [vmem:[%s219 + $0x51] sm:$0xff]
      %s237 = scalar_lea.vmem %s1, 4
      %v238 = vld [vmem:[%s237] sm:$0xf]
      %vm239 = vcmask 31744
      %v241 = vsel %vm239, %v229, 0
      %v244 = vsel %vm239, %v230, 0
      %v247 = vsel %vm239, %v231, 0
      %v250 = vsel %vm239, %v232, 0
      %v253 = vsel %vm239, %v233, 0
      %v256 = vsel %vm239, %v234, 0
      %v259 = vsel %vm239, %v235, 0
      %v262 = vsel %vm239, %v236, 0
      %vm264 = vcmask 1043456
      %v266 = vsel %vm264, %v238, 0
      %268 = vmatpush.msra.mxu0 0.0
      %269 = vmatpush.msra.mxu0 0.0
      %270 = vmatpush.msra.mxu0 0.0
      %271 = vmatpush.msra.mxu0 0.0
      %272 = vmatpush.msra.mxu0 0.0
      %273 = vmatpush.msra.mxu0 0.0
      %274 = vmatpush.msra.mxu0 0.0
      %275 = vmatpush.msra.mxu0 0.0
      %276 = vmatpush.msra.mxu0 0.0
      %277 = vmatpush.msra.mxu0 0.0
      %278 = vmatpush.msra.mxu0 0.0
      %279 = vmatpush.msra.mxu0 0.0
      %280 = vmatpush.msra.mxu0 0.0
      %281 = vmatpush.msra.mxu0 0.0
      %282 = vmatpush.msra.mxu0 0.0
      %283 = vmatpush.msra.mxu0 %v266
      %284 = vmatmul.f32.gmra.mxu0 %v241
      %v285 = vpop.f32.mrf.mxu0
      %v286 = vadd.f32 0.0, %v285
      %287 = vmatmul.f32.gmra.mxu0 %v244
      %v288 = vpop.f32.mrf.mxu0
      %v289 = vadd.f32 0.0, %v288
      %290 = vmatmul.f32.gmra.mxu0 %v247
      %v291 = vpop.f32.mrf.mxu0
      %v292 = vadd.f32 0.0, %v291
      %293 = vmatmul.f32.gmra.mxu0 %v250
      %v294 = vpop.f32.mrf.mxu0
      %v295 = vadd.f32 0.0, %v294
      %296 = vmatmul.f32.gmra.mxu0 %v253
      %v297 = vpop.f32.mrf.mxu0
      %v298 = vadd.f32 0.0, %v297
      %299 = vmatmul.f32.gmra.mxu0 %v256
      %v300 = vpop.f32.mrf.mxu0
      %v301 = vadd.f32 0.0, %v300
      %302 = vmatmul.f32.gmra.mxu0 %v259
      %v303 = vpop.f32.mrf.mxu0
      %v304 = vadd.f32 0.0, %v303
      %305 = vmatmul.f32.gmra.mxu0 %v262
      %v306 = vpop.f32.mrf.mxu0
      %v307 = vadd.f32 0.0, %v306
      %308 = vdwg.mxu0
      %v310 = vsel %vm239, %v220, 0
      %v313 = vsel %vm239, %v221, 0
      %v316 = vsel %vm239, %v222, 0
      %v319 = vsel %vm239, %v223, 0
      %v322 = vsel %vm239, %v224, 0
      %v325 = vsel %vm239, %v225, 0
      %v328 = vsel %vm239, %v226, 0
      %v331 = vsel %vm239, %v227, 0
      %v334 = vsel %vm264, %v228, 0
      %336 = vmatpush.msra.mxu0 0.0
      %337 = vmatpush.msra.mxu0 0.0
      %338 = vmatpush.msra.mxu0 0.0
      %339 = vmatpush.msra.mxu0 0.0
      %340 = vmatpush.msra.mxu0 0.0
      %341 = vmatpush.msra.mxu0 0.0
      %342 = vmatpush.msra.mxu0 0.0
      %343 = vmatpush.msra.mxu0 0.0
      %344 = vmatpush.msra.mxu0 0.0
      %345 = vmatpush.msra.mxu0 0.0
      %346 = vmatpush.msra.mxu0 0.0
      %347 = vmatpush.msra.mxu0 0.0
      %348 = vmatpush.msra.mxu0 0.0
      %349 = vmatpush.msra.mxu0 0.0
      %350 = vmatpush.msra.mxu0 0.0
      %351 = vmatpush.msra.mxu0 %v334
      %352 = vmatmul.f32.gmra.mxu0 %v310
      %v353 = vpop.f32.mrf.mxu0
      %v354 = vadd.f32 %v286, %v353
      %355 = vmatmul.f32.gmra.mxu0 %v313
      %v356 = vpop.f32.mrf.mxu0
      %v357 = vadd.f32 %v289, %v356
      %358 = vmatmul.f32.gmra.mxu0 %v316
      %v359 = vpop.f32.mrf.mxu0
      %v360 = vadd.f32 %v292, %v359
      %361 = vmatmul.f32.gmra.mxu0 %v319
      %v362 = vpop.f32.mrf.mxu0
      %v363 = vadd.f32 %v295, %v362
      %364 = vmatmul.f32.gmra.mxu0 %v322
      %v365 = vpop.f32.mrf.mxu0
      %v366 = vadd.f32 %v298, %v365
      %367 = vmatmul.f32.gmra.mxu0 %v325
      %v368 = vpop.f32.mrf.mxu0
      %v369 = vadd.f32 %v301, %v368
      %370 = vmatmul.f32.gmra.mxu0 %v328
      %v371 = vpop.f32.mrf.mxu0
      %v372 = vadd.f32 %v304, %v371
      %373 = vmatmul.f32.gmra.mxu0 %v331
      %v374 = vpop.f32.mrf.mxu0
      %v375 = vadd.f32 %v307, %v374
      %376 = vdwg.mxu0
      %v377 = vld [vmem:[%s219 + $0x2] sm:$0xff]
      %v378 = vld [vmem:[%s219 + $0xa] sm:$0xff]
      %v379 = vld [vmem:[%s219 + $0x1a] sm:$0xff]
      %v380 = vld [vmem:[%s219 + $0x22] sm:$0xff]
      %v381 = vld [vmem:[%s219 + $0x32] sm:$0xff]
      %v382 = vld [vmem:[%s219 + $0x3a] sm:$0xff]
      %v383 = vld [vmem:[%s219 + $0x4a] sm:$0xff]
      %v384 = vld [vmem:[%s219 + $0x52] sm:$0xff]
      %s385 = scalar_lea.vmem %s1, 8
      %v386 = vld [vmem:[%s385] sm:$0xf]
      %v388 = vsel %vm239, %v377, 0
      %v391 = vsel %vm239, %v378, 0
      %v394 = vsel %vm239, %v379, 0
      %v397 = vsel %vm239, %v380, 0
      %v400 = vsel %vm239, %v381, 0
      %v403 = vsel %vm239, %v382, 0
      %v406 = vsel %vm239, %v383, 0
      %v409 = vsel %vm239, %v384, 0
      %v412 = vsel %vm264, %v386, 0
      %414 = vmatpush.msra.mxu0 0.0
      %415 = vmatpush.msra.mxu0 0.0
      %416 = vmatpush.msra.mxu0 0.0
      %417 = vmatpush.msra.mxu0 0.0
      %418 = vmatpush.msra.mxu0 0.0
      %419 = vmatpush.msra.mxu0 0.0
      %420 = vmatpush.msra.mxu0 0.0
      %421 = vmatpush.msra.mxu0 0.0
      %422 = vmatpush.msra.mxu0 0.0
      %423 = vmatpush.msra.mxu0 0.0
      %424 = vmatpush.msra.mxu0 0.0
      %425 = vmatpush.msra.mxu0 0.0
      %426 = vmatpush.msra.mxu0 0.0
      %427 = vmatpush.msra.mxu0 0.0
      %428 = vmatpush.msra.mxu0 0.0
      %429 = vmatpush.msra.mxu0 %v412
      %430 = vmatmul.f32.gmra.mxu0 %v388
      %v431 = vpop.f32.mrf.mxu0
      %v432 = vadd.f32 0.0, %v431
      %433 = vmatmul.f32.gmra.mxu0 %v391
      %v434 = vpop.f32.mrf.mxu0
      %v435 = vadd.f32 0.0, %v434
      %436 = vmatmul.f32.gmra.mxu0 %v394
      %v437 = vpop.f32.mrf.mxu0
      %v438 = vadd.f32 0.0, %v437
      %439 = vmatmul.f32.gmra.mxu0 %v397
      %v440 = vpop.f32.mrf.mxu0
      %v441 = vadd.f32 0.0, %v440
      %442 = vmatmul.f32.gmra.mxu0 %v400
      %v443 = vpop.f32.mrf.mxu0
      %v444 = vadd.f32 0.0, %v443
      %445 = vmatmul.f32.gmra.mxu0 %v403
      %v446 = vpop.f32.mrf.mxu0
      %v447 = vadd.f32 0.0, %v446
      %448 = vmatmul.f32.gmra.mxu0 %v406
      %v449 = vpop.f32.mrf.mxu0
      %v450 = vadd.f32 0.0, %v449
      %451 = vmatmul.f32.gmra.mxu0 %v409
      %v452 = vpop.f32.mrf.mxu0
      %v453 = vadd.f32 0.0, %v452
      %454 = vdwg.mxu0
      %v455 = vadd.f32 %v354, %v432
      %v456 = vadd.f32 %v357, %v435
      %v457 = vadd.f32 %v360, %v438
      %v458 = vadd.f32 %v363, %v441
      %v459 = vadd.f32 %v366, %v444
      %v460 = vadd.f32 %v369, %v447
      %v461 = vadd.f32 %v372, %v450
      %v462 = vadd.f32 %v375, %v453
      %s463 = sadd.s32 %s217, 1
      %s464 = smul.u32 %s463, 24
      %s465 = scalar_lea.vmem %s197, %s464
      %v466 = vld [vmem:[%s465] sm:$0xff]
      %v467 = vld [vmem:[%s465 + $0x8] sm:$0xff]
      %v468 = vld [vmem:[%s465 + $0x18] sm:$0xff]
      %v469 = vld [vmem:[%s465 + $0x20] sm:$0xff]
      %v470 = vld [vmem:[%s465 + $0x30] sm:$0xff]
      %v471 = vld [vmem:[%s465 + $0x38] sm:$0xff]
      %v472 = vld [vmem:[%s465 + $0x48] sm:$0xff]
      %v473 = vld [vmem:[%s465 + $0x50] sm:$0xff]
      %s474 = scalar_lea.vmem %s1, 12
      %v475 = vld [vmem:[%s474] sm:$0xf]
      %v477 = vsel %vm239, %v466, 0
      %v480 = vsel %vm239, %v467, 0
      %v483 = vsel %vm239, %v468, 0
      %v486 = vsel %vm239, %v469, 0
      %v489 = vsel %vm239, %v470, 0
      %v492 = vsel %vm239, %v471, 0
      %v495 = vsel %vm239, %v472, 0
      %v498 = vsel %vm239, %v473, 0
      %v501 = vsel %vm264, %v475, 0
      %503 = vmatpush.msra.mxu0 0.0
      %504 = vmatpush.msra.mxu0 0.0
      %505 = vmatpush.msra.mxu0 0.0
      %506 = vmatpush.msra.mxu0 0.0
      %507 = vmatpush.msra.mxu0 0.0
      %508 = vmatpush.msra.mxu0 0.0
      %509 = vmatpush.msra.mxu0 0.0
      %510 = vmatpush.msra.mxu0 0.0
      %511 = vmatpush.msra.mxu0 0.0
      %512 = vmatpush.msra.mxu0 0.0
      %513 = vmatpush.msra.mxu0 0.0
      %514 = vmatpush.msra.mxu0 0.0
      %515 = vmatpush.msra.mxu0 0.0
      %516 = vmatpush.msra.mxu0 0.0
      %517 = vmatpush.msra.mxu0 0.0
      %518 = vmatpush.msra.mxu0 %v501
      %519 = vmatmul.f32.gmra.mxu0 %v477
      %v520 = vpop.f32.mrf.mxu0
      %v521 = vadd.f32 0.0, %v520
      %522 = vmatmul.f32.gmra.mxu0 %v480
      %v523 = vpop.f32.mrf.mxu0
      %v524 = vadd.f32 0.0, %v523
      %525 = vmatmul.f32.gmra.mxu0 %v483
      %v526 = vpop.f32.mrf.mxu0
      %v527 = vadd.f32 0.0, %v526
      %528 = vmatmul.f32.gmra.mxu0 %v486
      %v529 = vpop.f32.mrf.mxu0
      %v530 = vadd.f32 0.0, %v529
      %531 = vmatmul.f32.gmra.mxu0 %v489
      %v532 = vpop.f32.mrf.mxu0
      %v533 = vadd.f32 0.0, %v532
      %534 = vmatmul.f32.gmra.mxu0 %v492
      %v535 = vpop.f32.mrf.mxu0
      %v536 = vadd.f32 0.0, %v535
      %537 = vmatmul.f32.gmra.mxu0 %v495
      %v538 = vpop.f32.mrf.mxu0
      %v539 = vadd.f32 0.0, %v538
      %540 = vmatmul.f32.gmra.mxu0 %v498
      %v541 = vpop.f32.mrf.mxu0
      %v542 = vadd.f32 0.0, %v541
      %543 = vdwg.mxu0
      %v544 = vadd.f32 %v455, %v521
      %v545 = vadd.f32 %v456, %v524
      %v546 = vadd.f32 %v457, %v527
      %v547 = vadd.f32 %v458, %v530
      %v548 = vadd.f32 %v459, %v533
      %v549 = vadd.f32 %v460, %v536
      %v550 = vadd.f32 %v461, %v539
      %v551 = vadd.f32 %v462, %v542
      %v552 = vld [vmem:[%s465 + $0x1] sm:$0xff]
      %v553 = vld [vmem:[%s465 + $0x9] sm:$0xff]
      %v554 = vld [vmem:[%s465 + $0x19] sm:$0xff]
      %v555 = vld [vmem:[%s465 + $0x21] sm:$0xff]
      %v556 = vld [vmem:[%s465 + $0x31] sm:$0xff]
      %v557 = vld [vmem:[%s465 + $0x39] sm:$0xff]
      %v558 = vld [vmem:[%s465 + $0x49] sm:$0xff]
      %v559 = vld [vmem:[%s465 + $0x51] sm:$0xff]
      %s560 = scalar_lea.vmem %s1, 16
      %v561 = vld [vmem:[%s560] sm:$0xf]
      %v563 = vsel %vm239, %v552, 0
      %v566 = vsel %vm239, %v553, 0
      %v569 = vsel %vm239, %v554, 0
      %v572 = vsel %vm239, %v555, 0
      %v575 = vsel %vm239, %v556, 0
      %v578 = vsel %vm239, %v557, 0
      %v581 = vsel %vm239, %v558, 0
      %v584 = vsel %vm239, %v559, 0
      %v587 = vsel %vm264, %v561, 0
      %589 = vmatpush.msra.mxu0 0.0
      %590 = vmatpush.msra.mxu0 0.0
      %591 = vmatpush.msra.mxu0 0.0
      %592 = vmatpush.msra.mxu0 0.0
      %593 = vmatpush.msra.mxu0 0.0
      %594 = vmatpush.msra.mxu0 0.0
      %595 = vmatpush.msra.mxu0 0.0
      %596 = vmatpush.msra.mxu0 0.0
      %597 = vmatpush.msra.mxu0 0.0
      %598 = vmatpush.msra.mxu0 0.0
      %599 = vmatpush.msra.mxu0 0.0
      %600 = vmatpush.msra.mxu0 0.0
      %601 = vmatpush.msra.mxu0 0.0
      %602 = vmatpush.msra.mxu0 0.0
      %603 = vmatpush.msra.mxu0 0.0
      %604 = vmatpush.msra.mxu0 %v587
      %605 = vmatmul.f32.gmra.mxu0 %v563
      %v606 = vpop.f32.mrf.mxu0
      %v607 = vadd.f32 0.0, %v606
      %608 = vmatmul.f32.gmra.mxu0 %v566
      %v609 = vpop.f32.mrf.mxu0
      %v610 = vadd.f32 0.0, %v609
      %611 = vmatmul.f32.gmra.mxu0 %v569
      %v612 = vpop.f32.mrf.mxu0
      %v613 = vadd.f32 0.0, %v612
      %614 = vmatmul.f32.gmra.mxu0 %v572
      %v615 = vpop.f32.mrf.mxu0
      %v616 = vadd.f32 0.0, %v615
      %617 = vmatmul.f32.gmra.mxu0 %v575
      %v618 = vpop.f32.mrf.mxu0
      %v619 = vadd.f32 0.0, %v618
      %620 = vmatmul.f32.gmra.mxu0 %v578
      %v621 = vpop.f32.mrf.mxu0
      %v622 = vadd.f32 0.0, %v621
      %623 = vmatmul.f32.gmra.mxu0 %v581
      %v624 = vpop.f32.mrf.mxu0
      %v625 = vadd.f32 0.0, %v624
      %626 = vmatmul.f32.gmra.mxu0 %v584
      %v627 = vpop.f32.mrf.mxu0
      %v628 = vadd.f32 0.0, %v627
      %629 = vdwg.mxu0
      %v630 = vadd.f32 %v544, %v607
      %v631 = vadd.f32 %v545, %v610
      %v632 = vadd.f32 %v546, %v613
      %v633 = vadd.f32 %v547, %v616
      %v634 = vadd.f32 %v548, %v619
      %v635 = vadd.f32 %v549, %v622
      %v636 = vadd.f32 %v550, %v625
      %v637 = vadd.f32 %v551, %v628
      %v638 = vld [vmem:[%s465 + $0x2] sm:$0xff]
      %v639 = vld [vmem:[%s465 + $0xa] sm:$0xff]
      %v640 = vld [vmem:[%s465 + $0x1a] sm:$0xff]
      %v641 = vld [vmem:[%s465 + $0x22] sm:$0xff]
      %v642 = vld [vmem:[%s465 + $0x32] sm:$0xff]
      %v643 = vld [vmem:[%s465 + $0x3a] sm:$0xff]
      %v644 = vld [vmem:[%s465 + $0x4a] sm:$0xff]
      %v645 = vld [vmem:[%s465 + $0x52] sm:$0xff]
      %s646 = scalar_lea.vmem %s1, 20
      %v647 = vld [vmem:[%s646] sm:$0xf]
      %v649 = vsel %vm239, %v638, 0
      %v652 = vsel %vm239, %v639, 0
      %v655 = vsel %vm239, %v640, 0
      %v658 = vsel %vm239, %v641, 0
      %v661 = vsel %vm239, %v642, 0
      %v664 = vsel %vm239, %v643, 0
      %v667 = vsel %vm239, %v644, 0
      %v670 = vsel %vm239, %v645, 0
      %v673 = vsel %vm264, %v647, 0
      %675 = vmatpush.msra.mxu0 0.0
      %676 = vmatpush.msra.mxu0 0.0
      %677 = vmatpush.msra.mxu0 0.0
      %678 = vmatpush.msra.mxu0 0.0
      %679 = vmatpush.msra.mxu0 0.0
      %680 = vmatpush.msra.mxu0 0.0
      %681 = vmatpush.msra.mxu0 0.0
      %682 = vmatpush.msra.mxu0 0.0
      %683 = vmatpush.msra.mxu0 0.0
      %684 = vmatpush.msra.mxu0 0.0
      %685 = vmatpush.msra.mxu0 0.0
      %686 = vmatpush.msra.mxu0 0.0
      %687 = vmatpush.msra.mxu0 0.0
      %688 = vmatpush.msra.mxu0 0.0
      %689 = vmatpush.msra.mxu0 0.0
      %690 = vmatpush.msra.mxu0 %v673
      %691 = vmatmul.f32.gmra.mxu0 %v649
      %v692 = vpop.f32.mrf.mxu0
      %v693 = vadd.f32 0.0, %v692
      %694 = vmatmul.f32.gmra.mxu0 %v652
      %v695 = vpop.f32.mrf.mxu0
      %v696 = vadd.f32 0.0, %v695
      %697 = vmatmul.f32.gmra.mxu0 %v655
      %v698 = vpop.f32.mrf.mxu0
      %v699 = vadd.f32 0.0, %v698
      %700 = vmatmul.f32.gmra.mxu0 %v658
      %v701 = vpop.f32.mrf.mxu0
      %v702 = vadd.f32 0.0, %v701
      %703 = vmatmul.f32.gmra.mxu0 %v661
      %v704 = vpop.f32.mrf.mxu0
      %v705 = vadd.f32 0.0, %v704
      %706 = vmatmul.f32.gmra.mxu0 %v664
      %v707 = vpop.f32.mrf.mxu0
      %v708 = vadd.f32 0.0, %v707
      %709 = vmatmul.f32.gmra.mxu0 %v667
      %v710 = vpop.f32.mrf.mxu0
      %v711 = vadd.f32 0.0, %v710
      %712 = vmatmul.f32.gmra.mxu0 %v670
      %v713 = vpop.f32.mrf.mxu0
      %v714 = vadd.f32 0.0, %v713
      %715 = vdwg.mxu0
      %v716 = vadd.f32 %v630, %v693
      %v717 = vadd.f32 %v631, %v696
      %v718 = vadd.f32 %v632, %v699
      %v719 = vadd.f32 %v633, %v702
      %v720 = vadd.f32 %v634, %v705
      %v721 = vadd.f32 %v635, %v708
      %v722 = vadd.f32 %v636, %v711
      %v723 = vadd.f32 %v637, %v714
      %s724 = sadd.s32 %s217, 2
      %s725 = smul.u32 %s724, 24
      %s726 = scalar_lea.vmem %s197, %s725
      %v727 = vld [vmem:[%s726] sm:$0xff]
      %v728 = vld [vmem:[%s726 + $0x8] sm:$0xff]
      %v729 = vld [vmem:[%s726 + $0x18] sm:$0xff]
      %v730 = vld [vmem:[%s726 + $0x20] sm:$0xff]
      %v731 = vld [vmem:[%s726 + $0x30] sm:$0xff]
      %v732 = vld [vmem:[%s726 + $0x38] sm:$0xff]
      %v733 = vld [vmem:[%s726 + $0x48] sm:$0xff]
      %v734 = vld [vmem:[%s726 + $0x50] sm:$0xff]
      %s735 = scalar_lea.vmem %s1, 24
      %v736 = vld [vmem:[%s735] sm:$0xf]
      %v738 = vsel %vm239, %v727, 0
      %v741 = vsel %vm239, %v728, 0
      %v744 = vsel %vm239, %v729, 0
      %v747 = vsel %vm239, %v730, 0
      %v750 = vsel %vm239, %v731, 0
      %v753 = vsel %vm239, %v732, 0
      %v756 = vsel %vm239, %v733, 0
      %v759 = vsel %vm239, %v734, 0
      %v762 = vsel %vm264, %v736, 0
      %764 = vmatpush.msra.mxu0 0.0
      %765 = vmatpush.msra.mxu0 0.0
      %766 = vmatpush.msra.mxu0 0.0
      %767 = vmatpush.msra.mxu0 0.0
      %768 = vmatpush.msra.mxu0 0.0
      %769 = vmatpush.msra.mxu0 0.0
      %770 = vmatpush.msra.mxu0 0.0
      %771 = vmatpush.msra.mxu0 0.0
      %772 = vmatpush.msra.mxu0 0.0
      %773 = vmatpush.msra.mxu0 0.0
      %774 = vmatpush.msra.mxu0 0.0
      %775 = vmatpush.msra.mxu0 0.0
      %776 = vmatpush.msra.mxu0 0.0
      %777 = vmatpush.msra.mxu0 0.0
      %778 = vmatpush.msra.mxu0 0.0
      %779 = vmatpush.msra.mxu0 %v762
      %780 = vmatmul.f32.gmra.mxu0 %v738
      %v781 = vpop.f32.mrf.mxu0
      %v782 = vadd.f32 0.0, %v781
      %783 = vmatmul.f32.gmra.mxu0 %v741
      %v784 = vpop.f32.mrf.mxu0
      %v785 = vadd.f32 0.0, %v784
      %786 = vmatmul.f32.gmra.mxu0 %v744
      %v787 = vpop.f32.mrf.mxu0
      %v788 = vadd.f32 0.0, %v787
      %789 = vmatmul.f32.gmra.mxu0 %v747
      %v790 = vpop.f32.mrf.mxu0
      %v791 = vadd.f32 0.0, %v790
      %792 = vmatmul.f32.gmra.mxu0 %v750
      %v793 = vpop.f32.mrf.mxu0
      %v794 = vadd.f32 0.0, %v793
      %795 = vmatmul.f32.gmra.mxu0 %v753
      %v796 = vpop.f32.mrf.mxu0
      %v797 = vadd.f32 0.0, %v796
      %798 = vmatmul.f32.gmra.mxu0 %v756
      %v799 = vpop.f32.mrf.mxu0
      %v800 = vadd.f32 0.0, %v799
      %801 = vmatmul.f32.gmra.mxu0 %v759
      %v802 = vpop.f32.mrf.mxu0
      %v803 = vadd.f32 0.0, %v802
      %804 = vdwg.mxu0
      %v805 = vadd.f32 %v716, %v782
      %v806 = vadd.f32 %v717, %v785
      %v807 = vadd.f32 %v718, %v788
      %v808 = vadd.f32 %v719, %v791
      %v809 = vadd.f32 %v720, %v794
      %v810 = vadd.f32 %v721, %v797
      %v811 = vadd.f32 %v722, %v800
      %v812 = vadd.f32 %v723, %v803
      %v813 = vld [vmem:[%s726 + $0x1] sm:$0xff]
      %v814 = vld [vmem:[%s726 + $0x9] sm:$0xff]
      %v815 = vld [vmem:[%s726 + $0x19] sm:$0xff]
      %v816 = vld [vmem:[%s726 + $0x21] sm:$0xff]
      %v817 = vld [vmem:[%s726 + $0x31] sm:$0xff]
      %v818 = vld [vmem:[%s726 + $0x39] sm:$0xff]
      %v819 = vld [vmem:[%s726 + $0x49] sm:$0xff]
      %v820 = vld [vmem:[%s726 + $0x51] sm:$0xff]
      %s821 = scalar_lea.vmem %s1, 28
      %v822 = vld [vmem:[%s821] sm:$0xf]
      %v824 = vsel %vm239, %v813, 0
      %v827 = vsel %vm239, %v814, 0
      %v830 = vsel %vm239, %v815, 0
      %v833 = vsel %vm239, %v816, 0
      %v836 = vsel %vm239, %v817, 0
      %v839 = vsel %vm239, %v818, 0
      %v842 = vsel %vm239, %v819, 0
      %v845 = vsel %vm239, %v820, 0
      %v848 = vsel %vm264, %v822, 0
      %850 = vmatpush.msra.mxu0 0.0
      %851 = vmatpush.msra.mxu0 0.0
      %852 = vmatpush.msra.mxu0 0.0
      %853 = vmatpush.msra.mxu0 0.0
      %854 = vmatpush.msra.mxu0 0.0
      %855 = vmatpush.msra.mxu0 0.0
      %856 = vmatpush.msra.mxu0 0.0
      %857 = vmatpush.msra.mxu0 0.0
      %858 = vmatpush.msra.mxu0 0.0
      %859 = vmatpush.msra.mxu0 0.0
      %860 = vmatpush.msra.mxu0 0.0
      %861 = vmatpush.msra.mxu0 0.0
      %862 = vmatpush.msra.mxu0 0.0
      %863 = vmatpush.msra.mxu0 0.0
      %864 = vmatpush.msra.mxu0 0.0
      %865 = vmatpush.msra.mxu0 %v848
      %866 = vmatmul.f32.gmra.mxu0 %v824
      %v867 = vpop.f32.mrf.mxu0
      %v868 = vadd.f32 0.0, %v867
      %869 = vmatmul.f32.gmra.mxu0 %v827
      %v870 = vpop.f32.mrf.mxu0
      %v871 = vadd.f32 0.0, %v870
      %872 = vmatmul.f32.gmra.mxu0 %v830
      %v873 = vpop.f32.mrf.mxu0
      %v874 = vadd.f32 0.0, %v873
      %875 = vmatmul.f32.gmra.mxu0 %v833
      %v876 = vpop.f32.mrf.mxu0
      %v877 = vadd.f32 0.0, %v876
      %878 = vmatmul.f32.gmra.mxu0 %v836
      %v879 = vpop.f32.mrf.mxu0
      %v880 = vadd.f32 0.0, %v879
      %881 = vmatmul.f32.gmra.mxu0 %v839
      %v882 = vpop.f32.mrf.mxu0
      %v883 = vadd.f32 0.0, %v882
      %884 = vmatmul.f32.gmra.mxu0 %v842
      %v885 = vpop.f32.mrf.mxu0
      %v886 = vadd.f32 0.0, %v885
      %887 = vmatmul.f32.gmra.mxu0 %v845
      %v888 = vpop.f32.mrf.mxu0
      %v889 = vadd.f32 0.0, %v888
      %890 = vdwg.mxu0
      %v891 = vadd.f32 %v805, %v868
      %v892 = vadd.f32 %v806, %v871
      %v893 = vadd.f32 %v807, %v874
      %v894 = vadd.f32 %v808, %v877
      %v895 = vadd.f32 %v809, %v880
      %v896 = vadd.f32 %v810, %v883
      %v897 = vadd.f32 %v811, %v886
      %v898 = vadd.f32 %v812, %v889
      %v899 = vld [vmem:[%s726 + $0x2] sm:$0xff]
      %v900 = vld [vmem:[%s726 + $0xa] sm:$0xff]
      %v901 = vld [vmem:[%s726 + $0x1a] sm:$0xff]
      %v902 = vld [vmem:[%s726 + $0x22] sm:$0xff]
      %v903 = vld [vmem:[%s726 + $0x32] sm:$0xff]
      %v904 = vld [vmem:[%s726 + $0x3a] sm:$0xff]
      %v905 = vld [vmem:[%s726 + $0x4a] sm:$0xff]
      %v906 = vld [vmem:[%s726 + $0x52] sm:$0xff]
      %s907 = scalar_lea.vmem %s1, 32
      %v908 = vld [vmem:[%s907] sm:$0xf]
      %v910 = vsel %vm239, %v899, 0
      %v913 = vsel %vm239, %v900, 0
      %v916 = vsel %vm239, %v901, 0
      %v919 = vsel %vm239, %v902, 0
      %v922 = vsel %vm239, %v903, 0
      %v925 = vsel %vm239, %v904, 0
      %v928 = vsel %vm239, %v905, 0
      %v931 = vsel %vm239, %v906, 0
      %v934 = vsel %vm264, %v908, 0
      %936 = vmatpush.msra.mxu0 0.0
      %937 = vmatpush.msra.mxu0 0.0
      %938 = vmatpush.msra.mxu0 0.0
      %939 = vmatpush.msra.mxu0 0.0
      %940 = vmatpush.msra.mxu0 0.0
      %941 = vmatpush.msra.mxu0 0.0
      %942 = vmatpush.msra.mxu0 0.0
      %943 = vmatpush.msra.mxu0 0.0
      %944 = vmatpush.msra.mxu0 0.0
      %945 = vmatpush.msra.mxu0 0.0
      %946 = vmatpush.msra.mxu0 0.0
      %947 = vmatpush.msra.mxu0 0.0
      %948 = vmatpush.msra.mxu0 0.0
      %949 = vmatpush.msra.mxu0 0.0
      %950 = vmatpush.msra.mxu0 0.0
      %951 = vmatpush.msra.mxu0 %v934
      %952 = vmatmul.f32.gmra.mxu0 %v910
      %v953 = vpop.f32.mrf.mxu0
      %v954 = vadd.f32 0.0, %v953
      %955 = vmatmul.f32.gmra.mxu0 %v913
      %v956 = vpop.f32.mrf.mxu0
      %v957 = vadd.f32 0.0, %v956
      %958 = vmatmul.f32.gmra.mxu0 %v916
      %v959 = vpop.f32.mrf.mxu0
      %v960 = vadd.f32 0.0, %v959
      %961 = vmatmul.f32.gmra.mxu0 %v919
      %v962 = vpop.f32.mrf.mxu0
      %v963 = vadd.f32 0.0, %v962
      %964 = vmatmul.f32.gmra.mxu0 %v922
      %v965 = vpop.f32.mrf.mxu0
      %v966 = vadd.f32 0.0, %v965
      %967 = vmatmul.f32.gmra.mxu0 %v925
      %v968 = vpop.f32.mrf.mxu0
      %v969 = vadd.f32 0.0, %v968
      %970 = vmatmul.f32.gmra.mxu0 %v928
      %v971 = vpop.f32.mrf.mxu0
      %v972 = vadd.f32 0.0, %v971
      %973 = vmatmul.f32.gmra.mxu0 %v931
      %v974 = vpop.f32.mrf.mxu0
      %v975 = vadd.f32 0.0, %v974
      %976 = vdwg.mxu0
      %v977 = vadd.f32 %v891, %v954
      %v978 = vadd.f32 %v892, %v957
      %v979 = vadd.f32 %v893, %v960
      %v980 = vadd.f32 %v894, %v963
      %v981 = vadd.f32 %v895, %v966
      %v982 = vadd.f32 %v896, %v969
      %v983 = vadd.f32 %v897, %v972
      %v984 = vadd.f32 %v898, %v975
      %vm985 = vcmask 64512
      %986 = vst.msk [vmem:[%s207] sm:$0xff] %vm985, %v977
      %987 = vst.msk [vmem:[%s207 + $0x8] sm:$0xff] %vm985, %v978
      %988 = vst.msk [vmem:[%s207 + $0x10] sm:$0xff] %vm985, %v979
      %989 = vst.msk [vmem:[%s207 + $0x18] sm:$0xff] %vm985, %v980
      %990 = vst.msk [vmem:[%s207 + $0x20] sm:$0xff] %vm985, %v981
      %991 = vst.msk [vmem:[%s207 + $0x28] sm:$0xff] %vm985, %v982
      %992 = vst.msk [vmem:[%s207 + $0x30] sm:$0xff] %vm985, %v983
      %993 = vst.msk [vmem:[%s207 + $0x38] sm:$0xff] %vm985, %v984
      %v994 = vsel %vm985, %v977, 0.0
      %v995 = vsel %vm985, %v978, 0.0
      %v996 = vadd.f32 %v994, %v995
      %v997 = vsel %vm985, %v979, 0.0
      %v998 = vadd.f32 %v996, %v997
      %v999 = vsel %vm985, %v980, 0.0
      %v1000 = vadd.f32 %v998, %v999
      %v1001 = vsel %vm985, %v981, 0.0
      %v1002 = vadd.f32 %v1000, %v1001
      %v1003 = vsel %vm985, %v982, 0.0
      %v1004 = vadd.f32 %v1002, %v1003
      %v1005 = vsel %vm985, %v983, 0.0
      %v1006 = vadd.f32 %v1004, %v1005
      %v1007 = vsel %vm985, %v984, 0.0
      %v1008 = vadd.f32 %v1006, %v1007
      %v1009 = vrot.slane %v1008, 4
      %v1010 = vadd.f32 %v1008, %v1009
      %v1011 = vrot.slane %v1010, 2
      %v1012 = vadd.f32 %v1010, %v1011
      %v1013 = vrot.slane %v1012, 1
      %v1014 = vadd.f32 %v1012, %v1013
      %v1015 = vmul.f32 %v1014, 0.015625
      %v1016 = vsub.f32 %v977, %v1015
      %v1017 = vsub.f32 %v978, %v1015
      %v1018 = vsub.f32 %v979, %v1015
      %v1019 = vsub.f32 %v980, %v1015
      %v1020 = vsub.f32 %v981, %v1015
      %v1021 = vsub.f32 %v982, %v1015
      %v1022 = vsub.f32 %v983, %v1015
      %v1023 = vsub.f32 %v984, %v1015
      %vm1024 = vcmask 57344
      %1025 = vst.msk [vmem:[%s216] sm:$0x1] %vm1024, %v1015
      %v1026 = vmul.f32 %v1016, %v1016
      %v1027 = vmul.f32 %v1017, %v1017
      %v1028 = vmul.f32 %v1018, %v1018
      %v1029 = vmul.f32 %v1019, %v1019
      %v1030 = vmul.f32 %v1020, %v1020
      %v1031 = vmul.f32 %v1021, %v1021
      %v1032 = vmul.f32 %v1022, %v1022
      %v1033 = vmul.f32 %v1023, %v1023
      %v1034 = vsel %vm985, %v1026, 0.0
      %v1035 = vsel %vm985, %v1027, 0.0
      %v1036 = vadd.f32 %v1034, %v1035
      %v1037 = vsel %vm985, %v1028, 0.0
      %v1038 = vadd.f32 %v1036, %v1037
      %v1039 = vsel %vm985, %v1029, 0.0
      %v1040 = vadd.f32 %v1038, %v1039
      %v1041 = vsel %vm985, %v1030, 0.0
      %v1042 = vadd.f32 %v1040, %v1041
      %v1043 = vsel %vm985, %v1031, 0.0
      %v1044 = vadd.f32 %v1042, %v1043
      %v1045 = vsel %vm985, %v1032, 0.0
      %v1046 = vadd.f32 %v1044, %v1045
      %v1047 = vsel %vm985, %v1033, 0.0
      %v1048 = vadd.f32 %v1046, %v1047
      %v1049 = vrot.slane %v1048, 4
      %v1050 = vadd.f32 %v1048, %v1049
      %v1051 = vrot.slane %v1050, 2
      %v1052 = vadd.f32 %v1050, %v1051
      %v1053 = vrot.slane %v1052, 1
      %v1054 = vadd.f32 %v1052, %v1053
      %1055 = vst.msk [vmem:[%s216 + $0x1] sm:$0x1] %vm1024, %v1054
      %s1056 = smul.u32 4, %s20
      %p1057 = scmp.lt.s32.totalorder %s19, 1
      %s1058 = scalar_select %p1057, %s19, 1
      %p1059 = scmp.lt.s32.totalorder %s1056, 15
      %s1060 = scalar_select %p1059, %s1056, 15
      %s1061 = smul.addr %s1060, 2
      %s1062 = smul.addr %s1058, 32
      %s1063 = sadd.s32 %s1061, %s1062
      %s1064 = smul.addr %s1063, 8
      %s1065 = scalar_lea.vmem %s2, %s1064
      %p1066 = scmp.lt.s32.totalorder %s19, 1
      %s1067 = scalar_select %p1066, %s19, 1
      %p1068 = scmp.lt.s32.totalorder %s20, 3
      %s1069 = scalar_select %p1068, %s20, 3
      %s1070 = smul.addr %s1067, 4
      %s1071 = sadd.s32 %s1069, %s1070
      %s1072 = smul.addr %s1071, 2
      %s1073 = scalar_lea.vmem %s3, %s1072
      // Predicated region
      $region29: #{_basic_conv2d_impl.2} parent=27 // pred_check
        %p1074 = pneg %p94
      $region30: #{_basic_conv2d_impl.2} parent=27 // pred_check_branch
        %1076 = sbr.rel (%p1074) target = $region32
      $region31: #{_basic_conv2d_impl.2} parent=27 // pred_region
        %s1077 = smul.u32 4, %s20
      $region32: #{_basic_conv2d_impl.2} parent=27 // pred_fallthru
        _
      // Predicated region
      $region33: #{_basic_conv2d_impl.2} parent=27 // pred_check
        %p1078 = pneg %p122
      $region34: #{_basic_conv2d_impl.2} parent=27 // pred_check_branch
        %1080 = sbr.rel (%p1078) target = $region36
      $region35: #{_basic_conv2d_impl.2} parent=27 // pred_region
        _
      $region36: #{_basic_conv2d_impl.2} parent=27 // pred_fallthru
        _
    $region28: #{_basic_conv2d_impl.2} parent=5 // pred_fallthru
      _
    %p1081 = scmp.le.s32.totalorder 2, %s10
    // Predicated region
    $region37: #{_basic_conv2d_impl.2} parent=5 // pred_check
      %p1082 = pneg %p1081
    $region38: #{_basic_conv2d_impl.2} parent=5 // pred_check_branch
      %1084 = sbr.rel (%p1082) target = $region40
    $region39: #{_basic_conv2d_impl.2} parent=5 // pred_region
      %s1085 = ssub.s32 %s10, 2
      // Predicated region
      $region41: #{_basic_conv2d_impl.2} parent=39 // pred_check
        %p1086 = pneg %p100
      $region42: #{_basic_conv2d_impl.2} parent=39 // pred_check_branch
        %1088 = sbr.rel (%p1086) target = $region44
      $region43: #{_basic_conv2d_impl.2} parent=39 // pred_region
        %s1089 = smul.u32 4, %s22
        %p1090 = scmp.lt.s32.totalorder %s21, 1
        %s1091 = scalar_select %p1090, %s21, 1
        %p1092 = scmp.lt.s32.totalorder %s1089, 15
        %s1093 = scalar_select %p1092, %s1089, 15
        %s1094 = smul.addr %s1093, 2
        %s1095 = smul.addr %s1091, 32
        %s1096 = sadd.s32 %s1094, %s1095
        %s1097 = smul.addr %s1096, 8
        %s1098 = scalar_lea.vmem %s2, %s1097
      $region44: #{_basic_conv2d_impl.2} parent=39 // pred_fallthru
        _
      // Predicated region
      $region45: #{_basic_conv2d_impl.2} parent=39 // pred_check
        %p1099 = pneg %p128
      $region46: #{_basic_conv2d_impl.2} parent=39 // pred_check_branch
        %1101 = sbr.rel (%p1099) target = $region48
      $region47: #{_basic_conv2d_impl.2} parent=39 // pred_region
        %p1102 = scmp.lt.s32.totalorder %s21, 1
        %s1103 = scalar_select %p1102, %s21, 1
        %p1104 = scmp.lt.s32.totalorder %s22, 3
        %s1105 = scalar_select %p1104, %s22, 3
        %s1106 = smul.addr %s1103, 4
        %s1107 = sadd.s32 %s1105, %s1106
        %s1108 = smul.addr %s1107, 2
        %s1109 = scalar_lea.vmem %s3, %s1108
      $region48: #{_basic_conv2d_impl.2} parent=39 // pred_fallthru
        _
    $region40: #{_basic_conv2d_impl.2} parent=5 // pred_fallthru
      _
  $region6: #{_basic_conv2d_impl.2} parent=0 // loop_footer
    %s14 = sadd.s32 1, %s10
  $region7: #{_basic_conv2d_impl.2} parent=0 // loop_footer_branch
    %9 = sbr.rel target = $region3
  $region8: #{_basic_conv2d_impl.2} parent=0 // loop_exit
    _

</llo_original>
